<compile_context>
chip_gen: v7x
topology: tpu7x:2x2x1
jax: 0.10.0
libtpu: 0.0.40
codegen_flags: <defaults>
</compile_context>

<pallas_src>
import functools

import jax
import jax.numpy as jnp
from jax.experimental import pallas as pl
from jax.experimental.pallas import tpu as pltpu


# ------------------------------ fused kernel ------------------------------- #

def _bottleneck_kernel(xc_ref, xt_ref, xb_ref, w1_ref, w2_ref, w3_ref,
                       b1_ref, b2_ref, b3_ref, o_ref, h1_sc,
                       *, W, TH, d, planes, cin, cout):
    r = pl.program_id(1)
    n_r = pl.num_programs(1)
    RB = TH + 2 * d          # h1 tile rows (output rows + halo)
    M = TH * W               # flattened spatial positions of the output tile

    f32 = jnp.float32
    bf16 = jnp.bfloat16

    # ---- stage 1: 1x1 conv (BN scale folded into w1) + bias + ReLU ----------
    def conv1(x3d):  # x3d: (rows, W, cin) f32 -> (rows*W, planes) f32
        rows = x3d.shape[0]
        y = jnp.dot(x3d.reshape(rows * W, cin).astype(bf16), w1_ref[...],
                    preferred_element_type=f32)
        return jnp.maximum(y + b1_ref[...], 0.0)

    # Zero the d-wide guard columns of the padded h1 tile (rows are fully
    # rewritten below, so no stale data survives across grid iterations).
    zcol = jnp.zeros((RB, d, planes), bf16)
    h1_sc[:, 0:d, :] = zcol
    h1_sc[:, d + W:d + W + d, :] = zcol

    # Center rows [r*TH, r*TH + TH).
    h1c = conv1(xc_ref[0])
    h1_sc[d:d + TH, d:d + W, :] = h1c.reshape(TH, W, planes).astype(bf16)

    # Top halo rows [r*TH - d, r*TH). conv2's zero padding applies to the
    # bn1/relu output (h1), NOT to x, so the border mask is applied to h1.
    h1t = conv1(xt_ref[0])
    h1t = jnp.where(r > 0, h1t, 0.0)
    h1_sc[0:d, d:d + W, :] = h1t.reshape(d, W, planes).astype(bf16)

    # Bottom halo rows [r*TH + TH, r*TH + TH + d).
    h1b = conv1(xb_ref[0])
    h1b = jnp.where(r < n_r - 1, h1b, 0.0)
    h1_sc[d + TH:d + TH + d, d:d + W, :] = h1b.reshape(d, W, planes).astype(bf16)

    # ---- stage 2: 3x3 dilated conv (BN scale folded) + bias + ReLU ----------
    acc = jnp.zeros((M, planes), f32)
    for ky in range(3):
        for kx in range(3):
            tap = h1_sc[ky * d:ky * d + TH, kx * d:kx * d + W, :]   # (TH, W, P)
            acc = acc + jnp.dot(tap.reshape(M, planes), w2_ref[ky, kx],
                                preferred_element_type=f32)
    h2 = jnp.maximum(acc + b2_ref[...], 0.0)

    # ---- stage 3: 1x1 conv (BN scale folded) + bias + residual + ReLU -------
    y3 = jnp.dot(h2.astype(bf16), w3_ref[...], preferred_element_type=f32)
    y3 = y3 + b3_ref[...]
    res = xc_ref[0].reshape(M, cin)                                 # f32 identity
    out = jnp.maximum(y3 + res, 0.0)
    o_ref[0] = out.reshape(TH, W, cout)


# -------------------------------- wrapper ----------------------------------- #

def _fold_bn(gamma, beta, mean, var, eps=1e-5):
    scale = gamma / jnp.sqrt(var + eps)
    bias = beta - mean * scale
    return scale, bias


def _pick_row_tile(H, d, target):
    """Largest TH <= target with TH | H and d | TH (falls back to whole H)."""
    for t in range(min(target, H), d - 1, -1):
        if H % t == 0 and t % d == 0:
            return t
    return H


def bottleneck_forward(x_nchw, params, dilation=1, row_tile=None):
    """Fused Bottleneck.forward (stride=1, downsample=None). x: NCHW float32."""
    x = jnp.transpose(x_nchw, (0, 2, 3, 1))          # -> NHWC
    n, h, w, cin = x.shape
    planes = params["w1"].shape[1]
    cout = params["w3"].shape[1]
    assert cin == cout, "identity residual requires inplanes == planes*4"
    d = int(dilation)
    assert 1 <= d <= h

    # Fold inference-mode BN into per-channel scale/bias; fold scales into the
    # conv weights (output-channel axis), keep biases as f32 epilogue adds.
    s1, b1 = _fold_bn(params["g1"], params["be1"], params["m1"], params["v1"])
    s2, b2 = _fold_bn(params["g2"], params["be2"], params["m2"], params["v2"])
    s3, b3 = _fold_bn(params["g3"], params["be3"], params["m3"], params["v3"])
    w1f = (params["w1"] * s1[None, :]).astype(jnp.bfloat16)
    w2f = (params["w2"] * s2[None, None, None, :]).astype(jnp.bfloat16)
    w3f = (params["w3"] * s3[None, :]).astype(jnp.bfloat16)
    b1 = b1.reshape(1, planes).astype(jnp.float32)
    b2 = b2.reshape(1, planes).astype(jnp.float32)
    b3 = b3.reshape(1, cout).astype(jnp.float32)

    if row_tile is None:
        row_tile = 32
    th = _pick_row_tile(h, d, row_tile)
    nr = h // th
    rb = th + 2 * d
    hb = max(h // d, 1)                  # number of fully in-bounds d-row blocks
    thd = th // d if th % d == 0 else 0  # only used when nr > 1 (then d | th)

    kern = functools.partial(
        _bottleneck_kernel, W=w, TH=th, d=d, planes=planes, cin=cin, cout=cout)

    def center_map(ni, ri):
        return (ni, ri, 0, 0)

    def top_map(ni, ri):          # d rows just above the tile (clamped at border)
        return (ni, jnp.clip(ri * thd - 1, 0, hb - 1), 0, 0)

    def bot_map(ni, ri):          # d rows just below the tile (clamped at border)
        return (ni, jnp.clip((ri + 1) * thd, 0, hb - 1), 0, 0)

    # VMEM budget for this tiling (double-buffered pipelined blocks + scratch).
    vmem_need = (
        2 * th * w * cin * 4                    # x center blocks
        + 2 * 2 * d * w * cin * 4               # x halo blocks
        + 2 * th * w * cout * 4                 # output blocks
        + (cin * planes + 9 * planes * planes + planes * cout) * 2   # bf16 weights
        + rb * (w + 2 * d) * planes * 2         # h1 scratch (bf16)
        + th * w * (3 * planes + 2 * cout) * 4  # live f32 working values (rough)
    )
    # NOTE: re-derive the row tile / cap for v7x's 64 MiB physical VMEM.
    vmem_limit = int(min(max(vmem_need * 2, 32 * 1024 * 1024), 64 * 1024 * 1024))

    flops = 2 * n * h * w * (cin * planes + 9 * planes * planes + planes * cout)
    bytes_accessed = (
        n * h * w * cin * 4 * (1 + 2 * d / th)            # x (center + halo reads)
        + n * h * w * cout * 4                            # output
        + (cin * planes + 9 * planes * planes + planes * cout) * 2)
    cost = pl.CostEstimate(flops=int(flops), transcendentals=0,
                           bytes_accessed=int(bytes_accessed))

    out = pl.pallas_call(
        kern,
        out_shape=jax.ShapeDtypeStruct((n, h, w, cout), jnp.float32),
        grid=(n, nr),
        in_specs=[
            pl.BlockSpec((1, th, w, cin), center_map),
            pl.BlockSpec((1, d, w, cin), top_map),
            pl.BlockSpec((1, d, w, cin), bot_map),
            pl.BlockSpec((cin, planes), lambda ni, ri: (0, 0)),
            pl.BlockSpec((3, 3, planes, planes), lambda ni, ri: (0, 0, 0, 0)),
            pl.BlockSpec((planes, cout), lambda ni, ri: (0, 0)),
            pl.BlockSpec((1, planes), lambda ni, ri: (0, 0)),
            pl.BlockSpec((1, planes), lambda ni, ri: (0, 0)),
            pl.BlockSpec((1, cout), lambda ni, ri: (0, 0)),
        ],
        out_specs=pl.BlockSpec((1, th, w, cout), center_map),
        scratch_shapes=[pltpu.VMEM((rb, w + 2 * d, planes), jnp.bfloat16)],
        compiler_params=pltpu.CompilerParams(
            dimension_semantics=("parallel", "parallel"),
            vmem_limit_bytes=vmem_limit),
        cost_estimate=cost,
    )(x, x, x, w1f, w2f, w3f, b1, b2, b3)

    return jnp.transpose(out, (0, 3, 1, 2))          # -> NCHW


# --------------------------- pure-JAX reference ----------------------------- #

def bottleneck_reference(x_nchw, params, dilation=1):
    x = jnp.transpose(x_nchw, (0, 2, 3, 1))
    dn = ("NHWC", "HWIO", "NHWC")
    hp = jax.lax.Precision.HIGHEST
    s1, b1 = _fold_bn(params["g1"], params["be1"], params["m1"], params["v1"])
    s2, b2 = _fold_bn(params["g2"], params["be2"], params["m2"], params["v2"])
    s3, b3 = _fold_bn(params["g3"], params["be3"], params["m3"], params["v3"])

    y = jax.lax.conv_general_dilated(x, params["w1"][None, None], (1, 1), "VALID",
                                     dimension_numbers=dn, precision=hp)
    y = jnp.maximum(y * s1 + b1, 0.0)
    d = dilation
    y = jax.lax.conv_general_dilated(y, params["w2"], (1, 1), ((d, d), (d, d)),
                                     rhs_dilation=(d, d), dimension_numbers=dn,
                                     precision=hp)
    y = jnp.maximum(y * s2 + b2, 0.0)
    y = jax.lax.conv_general_dilated(y, params["w3"][None, None], (1, 1), "VALID",
                                     dimension_numbers=dn, precision=hp)
    y = y * s3 + b3
    y = jnp.maximum(y + x, 0.0)
    return jnp.transpose(y, (0, 3, 1, 2))


# --------------------------------- main ------------------------------------- #

def make_params(inplanes, planes, key):
    ks = jax.random.split(key, 12)
    exp = 4
    return {
        # conv weights (channels-last friendly):
        #  w1: [Cin, planes], w2: [3, 3, planes, planes] (HWIO), w3: [planes, planes*4]
        "w1": 0.1 * jax.random.normal(ks[0], (inplanes, planes), jnp.float32),
        "w2": 0.1 * jax.random.normal(ks[1], (3, 3, planes, planes), jnp.float32),
        "w3": 0.1 * jax.random.normal(ks[2], (planes, planes * exp), jnp.float32),
        # BN params (inference): gamma, beta, running mean, running var
        "g1": 1.0 + 0.1 * jax.random.normal(ks[3], (planes,), jnp.float32),
        "be1": 0.1 * jax.random.normal(ks[4], (planes,), jnp.float32),
        "m1": 0.1 * jax.random.normal(ks[5], (planes,), jnp.float32),
        "v1": 1.0 + 0.1 * jax.random.uniform(ks[6], (planes,), jnp.float32),
        "g2": 1.0 + 0.1 * jax.random.normal(ks[7], (planes,), jnp.float32),
        "be2": 0.1 * jax.random.normal(ks[8], (planes,), jnp.float32),
        "m2": 0.1 * jax.random.normal(ks[9], (planes,), jnp.float32),
        "v2": 1.0 + 0.1 * jax.random.uniform(ks[10], (planes,), jnp.float32),
        "g3": 1.0 + 0.05 * jax.random.normal(ks[11], (planes * exp,), jnp.float32),
        "be3": jnp.zeros((planes * exp,), jnp.float32),
        "m3": jnp.zeros((planes * exp,), jnp.float32),
        "v3": jnp.ones((planes * exp,), jnp.float32),
    }


if __name__ == "__main__":
    # Module defaults: stride=1, downsample=None => inplanes == planes * 4.
    N, planes, H, W = 2, 16, 16, 16
    inplanes = planes * 4  # 64

    key = jax.random.PRNGKey(0)
    kx, kp = jax.random.split(key)
    x = jax.random.normal(kx, (N, inplanes, H, W), jnp.float32)  # NCHW like PyTorch
    params = make_params(inplanes, planes, kp)

    # dilation=1, 4-row tiles (exercises top / interior / bottom halo paths)
    fwd1 = jax.jit(functools.partial(bottleneck_forward, dilation=1, row_tile=4))
    out1 = fwd1(x, params)
    jax.block_until_ready(out1)
    ref1 = bottleneck_reference(x, params, dilation=1)
    assert out1.shape == (N, inplanes, H, W)
    assert bool(jnp.all(jnp.isfinite(out1)))
    assert jnp.allclose(out1, ref1, rtol=5e-2, atol=5e-2), (
        "mismatch vs reference (dilation=1), max abs err "
        f"{float(jnp.max(jnp.abs(out1 - ref1)))}")

    # dilated branch (as used by the CCNet backbone), 8-row tiles
    fwd2 = jax.jit(functools.partial(bottleneck_forward, dilation=2, row_tile=8))
    out2 = fwd2(x, params)
    jax.block_until_ready(out2)
    ref2 = bottleneck_reference(x, params, dilation=2)
    assert jnp.allclose(out2, ref2, rtol=5e-2, atol=5e-2), (
        "mismatch vs reference (dilation=2), max abs err "
        f"{float(jnp.max(jnp.abs(out2 - ref2)))}")

    print("KERNEL_OK")
</pallas_src>

<mosaic_0001>
module attributes {stable_mosaic.version = 11 : i64} {
  func.func @_bottleneck_kernel(%arg0: i32, %arg1: i32, %arg2: memref<1x4x16x64xf32, #tpu.memory_space<vmem>>, %arg3: memref<1x1x16x64xf32, #tpu.memory_space<vmem>>, %arg4: memref<1x1x16x64xf32, #tpu.memory_space<vmem>>, %arg5: memref<64x16xbf16, #tpu.memory_space<vmem>>, %arg6: memref<3x3x16x16xbf16, #tpu.memory_space<vmem>>, %arg7: memref<16x64xbf16, #tpu.memory_space<vmem>>, %arg8: memref<1x16xf32, #tpu.memory_space<vmem>>, %arg9: memref<1x16xf32, #tpu.memory_space<vmem>>, %arg10: memref<1x64xf32, #tpu.memory_space<vmem>>, %arg11: memref<1x4x16x64xf32, #tpu.memory_space<vmem>>, %arg12: memref<6x18x16xbf16, #tpu.memory_space<vmem>>) attributes {dimension_semantics = [#tpu.dimension_semantics<parallel>, #tpu.dimension_semantics<parallel>], iteration_bounds = array<i64: 2, 4>, scalar_prefetch = 0 : i64, scratch_operands = 1 : i64, tpu.core_type = #tpu.core_type<tc>, window_params = [{transform_indices = @transform_0, window_bounds = array<i64: 1, 4, 16, 64>}, {transform_indices = @transform_1, window_bounds = array<i64: 1, 1, 16, 64>}, {transform_indices = @transform_2, window_bounds = array<i64: 1, 1, 16, 64>}, {pipeline_mode = #tpu.pipeline_mode<synchronous>, transform_indices = @transform_3, window_bounds = array<i64: 64, 16>}, {pipeline_mode = #tpu.pipeline_mode<synchronous>, transform_indices = @transform_4, window_bounds = array<i64: 3, 3, 16, 16>}, {pipeline_mode = #tpu.pipeline_mode<synchronous>, transform_indices = @transform_5, window_bounds = array<i64: 16, 64>}, {pipeline_mode = #tpu.pipeline_mode<synchronous>, transform_indices = @transform_6, window_bounds = array<i64: 1, 16>}, {pipeline_mode = #tpu.pipeline_mode<synchronous>, transform_indices = @transform_7, window_bounds = array<i64: 1, 16>}, {pipeline_mode = #tpu.pipeline_mode<synchronous>, transform_indices = @transform_8, window_bounds = array<i64: 1, 64>}, {transform_indices = @transform_9, window_bounds = array<i64: 1, 4, 16, 64>}]} {
    %cst = arith.constant 0.000000e+00 : bf16
    %0 = vector.broadcast %cst : bf16 to vector<6x1x16xbf16>
    %c0 = arith.constant 0 : index
    %c0_0 = arith.constant 0 : index
    %c0_1 = arith.constant 0 : index
    %1 = vector.load %arg12[%c0, %c0_0, %c0_1] : memref<6x18x16xbf16, #tpu.memory_space<vmem>>, vector<6x1x16xbf16>
    tpu.vector_store %arg12[%c0, %c0_0, %c0_1], %0 {strides = array<i32>} : memref<6x18x16xbf16, #tpu.memory_space<vmem>>, vector<6x1x16xbf16>,
    %c0_2 = arith.constant 0 : index
    %c17 = arith.constant 17 : index
    %c0_3 = arith.constant 0 : index
    %2 = vector.load %arg12[%c0_2, %c17, %c0_3] : memref<6x18x16xbf16, #tpu.memory_space<vmem>>, vector<6x1x16xbf16>
    tpu.vector_store %arg12[%c0_2, %c17, %c0_3], %0 {strides = array<i32>} : memref<6x18x16xbf16, #tpu.memory_space<vmem>>, vector<6x1x16xbf16>,
    %c0_4 = arith.constant 0 : index
    %c0_5 = arith.constant 0 : index
    %c0_6 = arith.constant 0 : index
    %c0_7 = arith.constant 0 : index
    %3 = vector.load %arg2[%c0_4, %c0_5, %c0_6, %c0_7] : memref<1x4x16x64xf32, #tpu.memory_space<vmem>>, vector<1x4x16x64xf32>
    %4 = vector.shape_cast %3 : vector<1x4x16x64xf32> to vector<4x16x64xf32>
    %5 = vector.shape_cast %4 : vector<4x16x64xf32> to vector<64x64xf32>
    %6 = arith.truncf %5 : vector<64x64xf32> to vector<64x64xbf16>
    %c0_8 = arith.constant 0 : index
    %c0_9 = arith.constant 0 : index
    %7 = vector.load %arg5[%c0_8, %c0_9] : memref<64x16xbf16, #tpu.memory_space<vmem>>, vector<64x16xbf16>
    %cst_10 = arith.constant dense<0.000000e+00> : vector<64x16xf32>
    %8 = tpu.matmul %6, %7, %cst_10 {dimension_numbers = #tpu.dot_dimension_numbers<[1], [0], [0], [1], [0, 0, 1, 1], [], []>} : vector<64x64xbf16>, vector<64x16xbf16>, vector<64x16xf32> -> vector<64x16xf32>
    %c0_11 = arith.constant 0 : index
    %c0_12 = arith.constant 0 : index
    %9 = vector.load %arg8[%c0_11, %c0_12] : memref<1x16xf32, #tpu.memory_space<vmem>>, vector<1x16xf32>
    %10 = vector.broadcast %9 : vector<1x16xf32> to vector<64x16xf32>
    %11 = arith.addf %8, %10 : vector<64x16xf32>
    %cst_13 = arith.constant 0.000000e+00 : f32
    %12 = vector.broadcast %cst_13 : f32 to vector<64x16xf32>
    %13 = arith.maximumf %11, %12 : vector<64x16xf32>
    %14 = vector.shape_cast %13 : vector<64x16xf32> to vector<4x16x16xf32>
    %15 = arith.truncf %14 : vector<4x16x16xf32> to vector<4x16x16xbf16>
    %c1 = arith.constant 1 : index
    %c1_14 = arith.constant 1 : index
    %c0_15 = arith.constant 0 : index
    %16 = vector.load %arg12[%c1, %c1_14, %c0_15] : memref<6x18x16xbf16, #tpu.memory_space<vmem>>, vector<4x16x16xbf16>
    tpu.vector_store %arg12[%c1, %c1_14, %c0_15], %15 {strides = array<i32>} : memref<6x18x16xbf16, #tpu.memory_space<vmem>>, vector<4x16x16xbf16>,
    %c0_16 = arith.constant 0 : index
    %c0_17 = arith.constant 0 : index
    %c0_18 = arith.constant 0 : index
    %c0_19 = arith.constant 0 : index
    %17 = vector.load %arg3[%c0_16, %c0_17, %c0_18, %c0_19] : memref<1x1x16x64xf32, #tpu.memory_space<vmem>>, vector<1x1x16x64xf32>
    %18 = vector.shape_cast %17 : vector<1x1x16x64xf32> to vector<1x16x64xf32>
    %19 = vector.shape_cast %18 : vector<1x16x64xf32> to vector<16x64xf32>
    %20 = arith.truncf %19 : vector<16x64xf32> to vector<16x64xbf16>
    %c0_20 = arith.constant 0 : index
    %c0_21 = arith.constant 0 : index
    %21 = vector.load %arg5[%c0_20, %c0_21] : memref<64x16xbf16, #tpu.memory_space<vmem>>, vector<64x16xbf16>
    %cst_22 = arith.constant dense<0.000000e+00> : vector<16x16xf32>
    %22 = tpu.matmul %20, %21, %cst_22 {dimension_numbers = #tpu.dot_dimension_numbers<[1], [0], [0], [1], [0, 0, 1, 1], [], []>} : vector<16x64xbf16>, vector<64x16xbf16>, vector<16x16xf32> -> vector<16x16xf32>
    %c0_23 = arith.constant 0 : index
    %c0_24 = arith.constant 0 : index
    %23 = vector.load %arg8[%c0_23, %c0_24] : memref<1x16xf32, #tpu.memory_space<vmem>>, vector<1x16xf32>
    %24 = vector.broadcast %23 : vector<1x16xf32> to vector<16x16xf32>
    %25 = arith.addf %22, %24 : vector<16x16xf32>
    %cst_25 = arith.constant 0.000000e+00 : f32
    %26 = vector.broadcast %cst_25 : f32 to vector<16x16xf32>
    %27 = arith.maximumf %25, %26 : vector<16x16xf32>
    %c0_i32 = arith.constant 0 : i32
    %28 = arith.cmpi sgt, %arg1, %c0_i32 : i32
    %cst_26 = arith.constant 0.000000e+00 : f32
    %29 = vector.broadcast %cst_26 : f32 to vector<16x16xf32>
    %30 = arith.select %28, %27, %29 : vector<16x16xf32>
    %31 = vector.shape_cast %30 : vector<16x16xf32> to vector<1x16x16xf32>
    %32 = arith.truncf %31 : vector<1x16x16xf32> to vector<1x16x16xbf16>
    %c0_27 = arith.constant 0 : index
    %c1_28 = arith.constant 1 : index
    %c0_29 = arith.constant 0 : index
    %33 = vector.load %arg12[%c0_27, %c1_28, %c0_29] : memref<6x18x16xbf16, #tpu.memory_space<vmem>>, vector<1x16x16xbf16>
    tpu.vector_store %arg12[%c0_27, %c1_28, %c0_29], %32 {strides = array<i32>} : memref<6x18x16xbf16, #tpu.memory_space<vmem>>, vector<1x16x16xbf16>,
    %c0_30 = arith.constant 0 : index
    %c0_31 = arith.constant 0 : index
    %c0_32 = arith.constant 0 : index
    %c0_33 = arith.constant 0 : index
    %34 = vector.load %arg4[%c0_30, %c0_31, %c0_32, %c0_33] : memref<1x1x16x64xf32, #tpu.memory_space<vmem>>, vector<1x1x16x64xf32>
    %35 = vector.shape_cast %34 : vector<1x1x16x64xf32> to vector<1x16x64xf32>
    %36 = vector.shape_cast %35 : vector<1x16x64xf32> to vector<16x64xf32>
    %37 = arith.truncf %36 : vector<16x64xf32> to vector<16x64xbf16>
    %c0_34 = arith.constant 0 : index
    %c0_35 = arith.constant 0 : index
    %38 = vector.load %arg5[%c0_34, %c0_35] : memref<64x16xbf16, #tpu.memory_space<vmem>>, vector<64x16xbf16>
    %cst_36 = arith.constant dense<0.000000e+00> : vector<16x16xf32>
    %39 = tpu.matmul %37, %38, %cst_36 {dimension_numbers = #tpu.dot_dimension_numbers<[1], [0], [0], [1], [0, 0, 1, 1], [], []>} : vector<16x64xbf16>, vector<64x16xbf16>, vector<16x16xf32> -> vector<16x16xf32>
    %c0_37 = arith.constant 0 : index
    %c0_38 = arith.constant 0 : index
    %40 = vector.load %arg8[%c0_37, %c0_38] : memref<1x16xf32, #tpu.memory_space<vmem>>, vector<1x16xf32>
    %41 = vector.broadcast %40 : vector<1x16xf32> to vector<16x16xf32>
    %42 = arith.addf %39, %41 : vector<16x16xf32>
    %cst_39 = arith.constant 0.000000e+00 : f32
    %43 = vector.broadcast %cst_39 : f32 to vector<16x16xf32>
    %44 = arith.maximumf %42, %43 : vector<16x16xf32>
    %c3_i32 = arith.constant 3 : i32
    %45 = arith.cmpi slt, %arg1, %c3_i32 : i32
    %cst_40 = arith.constant 0.000000e+00 : f32
    %46 = vector.broadcast %cst_40 : f32 to vector<16x16xf32>
    %47 = arith.select %45, %44, %46 : vector<16x16xf32>
    %48 = vector.shape_cast %47 : vector<16x16xf32> to vector<1x16x16xf32>
    %49 = arith.truncf %48 : vector<1x16x16xf32> to vector<1x16x16xbf16>
    %c5 = arith.constant 5 : index
    %c1_41 = arith.constant 1 : index
    %c0_42 = arith.constant 0 : index
    %50 = vector.load %arg12[%c5, %c1_41, %c0_42] : memref<6x18x16xbf16, #tpu.memory_space<vmem>>, vector<1x16x16xbf16>
    tpu.vector_store %arg12[%c5, %c1_41, %c0_42], %49 {strides = array<i32>} : memref<6x18x16xbf16, #tpu.memory_space<vmem>>, vector<1x16x16xbf16>,
    %cst_43 = arith.constant 0.000000e+00 : f32
    %51 = vector.broadcast %cst_43 : f32 to vector<64x16xf32>
    %c0_44 = arith.constant 0 : index
    %c0_45 = arith.constant 0 : index
    %c0_46 = arith.constant 0 : index
    %52 = vector.load %arg12[%c0_44, %c0_45, %c0_46] : memref<6x18x16xbf16, #tpu.memory_space<vmem>>, vector<4x16x16xbf16>
    %53 = vector.shape_cast %52 : vector<4x16x16xbf16> to vector<64x16xbf16>
    %c0_47 = arith.constant 0 : index
    %c0_48 = arith.constant 0 : index
    %c0_49 = arith.constant 0 : index
    %c0_50 = arith.constant 0 : index
    %54 = vector.load %arg6[%c0_47, %c0_48, %c0_49, %c0_50] : memref<3x3x16x16xbf16, #tpu.memory_space<vmem>>, vector<1x1x16x16xbf16>
    %55 = vector.shape_cast %54 : vector<1x1x16x16xbf16> to vector<16x16xbf16>
    %cst_51 = arith.constant dense<0.000000e+00> : vector<64x16xf32>
    %56 = tpu.matmul %53, %55, %cst_51 {dimension_numbers = #tpu.dot_dimension_numbers<[1], [0], [0], [1], [0, 0, 1, 1], [], []>} : vector<64x16xbf16>, vector<16x16xbf16>, vector<64x16xf32> -> vector<64x16xf32>
    %57 = arith.addf %51, %56 : vector<64x16xf32>
    %c0_52 = arith.constant 0 : index
    %c1_53 = arith.constant 1 : index
    %c0_54 = arith.constant 0 : index
    %58 = vector.load %arg12[%c0_52, %c1_53, %c0_54] : memref<6x18x16xbf16, #tpu.memory_space<vmem>>, vector<4x16x16xbf16>
    %59 = vector.shape_cast %58 : vector<4x16x16xbf16> to vector<64x16xbf16>
    %c0_55 = arith.constant 0 : index
    %c1_56 = arith.constant 1 : index
    %c0_57 = arith.constant 0 : index
    %c0_58 = arith.constant 0 : index
    %60 = vector.load %arg6[%c0_55, %c1_56, %c0_57, %c0_58] : memref<3x3x16x16xbf16, #tpu.memory_space<vmem>>, vector<1x1x16x16xbf16>
    %61 = vector.shape_cast %60 : vector<1x1x16x16xbf16> to vector<16x16xbf16>
    %cst_59 = arith.constant dense<0.000000e+00> : vector<64x16xf32>
    %62 = tpu.matmul %59, %61, %cst_59 {dimension_numbers = #tpu.dot_dimension_numbers<[1], [0], [0], [1], [0, 0, 1, 1], [], []>} : vector<64x16xbf16>, vector<16x16xbf16>, vector<64x16xf32> -> vector<64x16xf32>
    %63 = arith.addf %57, %62 : vector<64x16xf32>
    %c0_60 = arith.constant 0 : index
    %c2 = arith.constant 2 : index
    %c0_61 = arith.constant 0 : index
    %64 = vector.load %arg12[%c0_60, %c2, %c0_61] : memref<6x18x16xbf16, #tpu.memory_space<vmem>>, vector<4x16x16xbf16>
    %65 = vector.shape_cast %64 : vector<4x16x16xbf16> to vector<64x16xbf16>
    %c0_62 = arith.constant 0 : index
    %c2_63 = arith.constant 2 : index
    %c0_64 = arith.constant 0 : index
    %c0_65 = arith.constant 0 : index
    %66 = vector.load %arg6[%c0_62, %c2_63, %c0_64, %c0_65] : memref<3x3x16x16xbf16, #tpu.memory_space<vmem>>, vector<1x1x16x16xbf16>
    %67 = vector.shape_cast %66 : vector<1x1x16x16xbf16> to vector<16x16xbf16>
    %cst_66 = arith.constant dense<0.000000e+00> : vector<64x16xf32>
    %68 = tpu.matmul %65, %67, %cst_66 {dimension_numbers = #tpu.dot_dimension_numbers<[1], [0], [0], [1], [0, 0, 1, 1], [], []>} : vector<64x16xbf16>, vector<16x16xbf16>, vector<64x16xf32> -> vector<64x16xf32>
    %69 = arith.addf %63, %68 : vector<64x16xf32>
    %c1_67 = arith.constant 1 : index
    %c0_68 = arith.constant 0 : index
    %c0_69 = arith.constant 0 : index
    %70 = vector.load %arg12[%c1_67, %c0_68, %c0_69] : memref<6x18x16xbf16, #tpu.memory_space<vmem>>, vector<4x16x16xbf16>
    %71 = vector.shape_cast %70 : vector<4x16x16xbf16> to vector<64x16xbf16>
    %c1_70 = arith.constant 1 : index
    %c0_71 = arith.constant 0 : index
    %c0_72 = arith.constant 0 : index
    %c0_73 = arith.constant 0 : index
    %72 = vector.load %arg6[%c1_70, %c0_71, %c0_72, %c0_73] : memref<3x3x16x16xbf16, #tpu.memory_space<vmem>>, vector<1x1x16x16xbf16>
    %73 = vector.shape_cast %72 : vector<1x1x16x16xbf16> to vector<16x16xbf16>
    %cst_74 = arith.constant dense<0.000000e+00> : vector<64x16xf32>
    %74 = tpu.matmul %71, %73, %cst_74 {dimension_numbers = #tpu.dot_dimension_numbers<[1], [0], [0], [1], [0, 0, 1, 1], [], []>} : vector<64x16xbf16>, vector<16x16xbf16>, vector<64x16xf32> -> vector<64x16xf32>
    %75 = arith.addf %69, %74 : vector<64x16xf32>
    %c1_75 = arith.constant 1 : index
    %c1_76 = arith.constant 1 : index
    %c0_77 = arith.constant 0 : index
    %76 = vector.load %arg12[%c1_75, %c1_76, %c0_77] : memref<6x18x16xbf16, #tpu.memory_space<vmem>>, vector<4x16x16xbf16>
    %77 = vector.shape_cast %76 : vector<4x16x16xbf16> to vector<64x16xbf16>
    %c1_78 = arith.constant 1 : index
    %c1_79 = arith.constant 1 : index
    %c0_80 = arith.constant 0 : index
    %c0_81 = arith.constant 0 : index
    %78 = vector.load %arg6[%c1_78, %c1_79, %c0_80, %c0_81] : memref<3x3x16x16xbf16, #tpu.memory_space<vmem>>, vector<1x1x16x16xbf16>
    %79 = vector.shape_cast %78 : vector<1x1x16x16xbf16> to vector<16x16xbf16>
    %cst_82 = arith.constant dense<0.000000e+00> : vector<64x16xf32>
    %80 = tpu.matmul %77, %79, %cst_82 {dimension_numbers = #tpu.dot_dimension_numbers<[1], [0], [0], [1], [0, 0, 1, 1], [], []>} : vector<64x16xbf16>, vector<16x16xbf16>, vector<64x16xf32> -> vector<64x16xf32>
    %81 = arith.addf %75, %80 : vector<64x16xf32>
    %c1_83 = arith.constant 1 : index
    %c2_84 = arith.constant 2 : index
    %c0_85 = arith.constant 0 : index
    %82 = vector.load %arg12[%c1_83, %c2_84, %c0_85] : memref<6x18x16xbf16, #tpu.memory_space<vmem>>, vector<4x16x16xbf16>
    %83 = vector.shape_cast %82 : vector<4x16x16xbf16> to vector<64x16xbf16>
    %c1_86 = arith.constant 1 : index
    %c2_87 = arith.constant 2 : index
    %c0_88 = arith.constant 0 : index
    %c0_89 = arith.constant 0 : index
    %84 = vector.load %arg6[%c1_86, %c2_87, %c0_88, %c0_89] : memref<3x3x16x16xbf16, #tpu.memory_space<vmem>>, vector<1x1x16x16xbf16>
    %85 = vector.shape_cast %84 : vector<1x1x16x16xbf16> to vector<16x16xbf16>
    %cst_90 = arith.constant dense<0.000000e+00> : vector<64x16xf32>
    %86 = tpu.matmul %83, %85, %cst_90 {dimension_numbers = #tpu.dot_dimension_numbers<[1], [0], [0], [1], [0, 0, 1, 1], [], []>} : vector<64x16xbf16>, vector<16x16xbf16>, vector<64x16xf32> -> vector<64x16xf32>
    %87 = arith.addf %81, %86 : vector<64x16xf32>
    %c2_91 = arith.constant 2 : index
    %c0_92 = arith.constant 0 : index
    %c0_93 = arith.constant 0 : index
    %88 = vector.load %arg12[%c2_91, %c0_92, %c0_93] : memref<6x18x16xbf16, #tpu.memory_space<vmem>>, vector<4x16x16xbf16>
    %89 = vector.shape_cast %88 : vector<4x16x16xbf16> to vector<64x16xbf16>
    %c2_94 = arith.constant 2 : index
    %c0_95 = arith.constant 0 : index
    %c0_96 = arith.constant 0 : index
    %c0_97 = arith.constant 0 : index
    %90 = vector.load %arg6[%c2_94, %c0_95, %c0_96, %c0_97] : memref<3x3x16x16xbf16, #tpu.memory_space<vmem>>, vector<1x1x16x16xbf16>
    %91 = vector.shape_cast %90 : vector<1x1x16x16xbf16> to vector<16x16xbf16>
    %cst_98 = arith.constant dense<0.000000e+00> : vector<64x16xf32>
    %92 = tpu.matmul %89, %91, %cst_98 {dimension_numbers = #tpu.dot_dimension_numbers<[1], [0], [0], [1], [0, 0, 1, 1], [], []>} : vector<64x16xbf16>, vector<16x16xbf16>, vector<64x16xf32> -> vector<64x16xf32>
    %93 = arith.addf %87, %92 : vector<64x16xf32>
    %c2_99 = arith.constant 2 : index
    %c1_100 = arith.constant 1 : index
    %c0_101 = arith.constant 0 : index
    %94 = vector.load %arg12[%c2_99, %c1_100, %c0_101] : memref<6x18x16xbf16, #tpu.memory_space<vmem>>, vector<4x16x16xbf16>
    %95 = vector.shape_cast %94 : vector<4x16x16xbf16> to vector<64x16xbf16>
    %c2_102 = arith.constant 2 : index
    %c1_103 = arith.constant 1 : index
    %c0_104 = arith.constant 0 : index
    %c0_105 = arith.constant 0 : index
    %96 = vector.load %arg6[%c2_102, %c1_103, %c0_104, %c0_105] : memref<3x3x16x16xbf16, #tpu.memory_space<vmem>>, vector<1x1x16x16xbf16>
    %97 = vector.shape_cast %96 : vector<1x1x16x16xbf16> to vector<16x16xbf16>
    %cst_106 = arith.constant dense<0.000000e+00> : vector<64x16xf32>
    %98 = tpu.matmul %95, %97, %cst_106 {dimension_numbers = #tpu.dot_dimension_numbers<[1], [0], [0], [1], [0, 0, 1, 1], [], []>} : vector<64x16xbf16>, vector<16x16xbf16>, vector<64x16xf32> -> vector<64x16xf32>
    %99 = arith.addf %93, %98 : vector<64x16xf32>
    %c2_107 = arith.constant 2 : index
    %c2_108 = arith.constant 2 : index
    %c0_109 = arith.constant 0 : index
    %100 = vector.load %arg12[%c2_107, %c2_108, %c0_109] : memref<6x18x16xbf16, #tpu.memory_space<vmem>>, vector<4x16x16xbf16>
    %101 = vector.shape_cast %100 : vector<4x16x16xbf16> to vector<64x16xbf16>
    %c2_110 = arith.constant 2 : index
    %c2_111 = arith.constant 2 : index
    %c0_112 = arith.constant 0 : index
    %c0_113 = arith.constant 0 : index
    %102 = vector.load %arg6[%c2_110, %c2_111, %c0_112, %c0_113] : memref<3x3x16x16xbf16, #tpu.memory_space<vmem>>, vector<1x1x16x16xbf16>
    %103 = vector.shape_cast %102 : vector<1x1x16x16xbf16> to vector<16x16xbf16>
    %cst_114 = arith.constant dense<0.000000e+00> : vector<64x16xf32>
    %104 = tpu.matmul %101, %103, %cst_114 {dimension_numbers = #tpu.dot_dimension_numbers<[1], [0], [0], [1], [0, 0, 1, 1], [], []>} : vector<64x16xbf16>, vector<16x16xbf16>, vector<64x16xf32> -> vector<64x16xf32>
    %105 = arith.addf %99, %104 : vector<64x16xf32>
    %c0_115 = arith.constant 0 : index
    %c0_116 = arith.constant 0 : index
    %106 = vector.load %arg9[%c0_115, %c0_116] : memref<1x16xf32, #tpu.memory_space<vmem>>, vector<1x16xf32>
    %107 = vector.broadcast %106 : vector<1x16xf32> to vector<64x16xf32>
    %108 = arith.addf %105, %107 : vector<64x16xf32>
    %cst_117 = arith.constant 0.000000e+00 : f32
    %109 = vector.broadcast %cst_117 : f32 to vector<64x16xf32>
    %110 = arith.maximumf %108, %109 : vector<64x16xf32>
    %111 = arith.truncf %110 : vector<64x16xf32> to vector<64x16xbf16>
    %c0_118 = arith.constant 0 : index
    %c0_119 = arith.constant 0 : index
    %112 = vector.load %arg7[%c0_118, %c0_119] : memref<16x64xbf16, #tpu.memory_space<vmem>>, vector<16x64xbf16>
    %cst_120 = arith.constant dense<0.000000e+00> : vector<64x64xf32>
    %113 = tpu.matmul %111, %112, %cst_120 {dimension_numbers = #tpu.dot_dimension_numbers<[1], [0], [0], [1], [0, 0, 1, 1], [], []>} : vector<64x16xbf16>, vector<16x64xbf16>, vector<64x64xf32> -> vector<64x64xf32>
    %c0_121 = arith.constant 0 : index
    %c0_122 = arith.constant 0 : index
    %114 = vector.load %arg10[%c0_121, %c0_122] : memref<1x64xf32, #tpu.memory_space<vmem>>, vector<1x64xf32>
    %115 = vector.broadcast %114 : vector<1x64xf32> to vector<64x64xf32>
    %116 = arith.addf %113, %115 : vector<64x64xf32>
    %c0_123 = arith.constant 0 : index
    %c0_124 = arith.constant 0 : index
    %c0_125 = arith.constant 0 : index
    %c0_126 = arith.constant 0 : index
    %117 = vector.load %arg2[%c0_123, %c0_124, %c0_125, %c0_126] : memref<1x4x16x64xf32, #tpu.memory_space<vmem>>, vector<1x4x16x64xf32>
    %118 = vector.shape_cast %117 : vector<1x4x16x64xf32> to vector<4x16x64xf32>
    %119 = vector.shape_cast %118 : vector<4x16x64xf32> to vector<64x64xf32>
    %120 = arith.addf %116, %119 : vector<64x64xf32>
    %cst_127 = arith.constant 0.000000e+00 : f32
    %121 = vector.broadcast %cst_127 : f32 to vector<64x64xf32>
    %122 = arith.maximumf %120, %121 : vector<64x64xf32>
    %123 = vector.shape_cast %122 : vector<64x64xf32> to vector<4x16x64xf32>
    %c0_128 = arith.constant 0 : index
    %c0_129 = arith.constant 0 : index
    %c0_130 = arith.constant 0 : index
    %c0_131 = arith.constant 0 : index
    %124 = vector.load %arg11[%c0_128, %c0_129, %c0_130, %c0_131] : memref<1x4x16x64xf32, #tpu.memory_space<vmem>>, vector<1x4x16x64xf32>
    %125 = vector.shape_cast %124 : vector<1x4x16x64xf32> to vector<4x16x64xf32>
    %126 = vector.shape_cast %123 : vector<4x16x64xf32> to vector<1x4x16x64xf32>
    tpu.vector_store %arg11[%c0_128, %c0_129, %c0_130, %c0_131], %126 {strides = array<i32>} : memref<1x4x16x64xf32, #tpu.memory_space<vmem>>, vector<1x4x16x64xf32>,
    return
  }
  func.func @transform_0(%arg0: i32, %arg1: i32) -> (i32, i32, i32, i32) {
    %c0_i32 = arith.constant 0 : i32
    %c0_i32_0 = arith.constant 0 : i32
    %c0_i32_1 = arith.constant 0 : i32
    return %arg0, %arg1, %c0_i32, %c0_i32_0 : i32, i32, i32, i32
  }
  func.func @transform_1(%arg0: i32, %arg1: i32) -> (i32, i32, i32, i32) {
    %c4_i32 = arith.constant 4 : i32
    %0 = arith.muli %arg1, %c4_i32 : i32
    %c1_i32 = arith.constant 1 : i32
    %1 = arith.subi %0, %c1_i32 : i32
    %c0_i32 = arith.constant 0 : i32
    %c15_i32 = arith.constant 15 : i32
    %2 = arith.maxsi %c0_i32, %1 : i32
    %3 = arith.minsi %c15_i32, %2 : i32
    %c0_i32_0 = arith.constant 0 : i32
    %c0_i32_1 = arith.constant 0 : i32
    %c0_i32_2 = arith.constant 0 : i32
    return %arg0, %3, %c0_i32_0, %c0_i32_1 : i32, i32, i32, i32
  }
  func.func @transform_2(%arg0: i32, %arg1: i32) -> (i32, i32, i32, i32) {
    %c1_i32 = arith.constant 1 : i32
    %0 = arith.addi %arg1, %c1_i32 : i32
    %c4_i32 = arith.constant 4 : i32
    %1 = arith.muli %0, %c4_i32 : i32
    %c0_i32 = arith.constant 0 : i32
    %c15_i32 = arith.constant 15 : i32
    %2 = arith.maxsi %c0_i32, %1 : i32
    %3 = arith.minsi %c15_i32, %2 : i32
    %c0_i32_0 = arith.constant 0 : i32
    %c0_i32_1 = arith.constant 0 : i32
    %c0_i32_2 = arith.constant 0 : i32
    return %arg0, %3, %c0_i32_0, %c0_i32_1 : i32, i32, i32, i32
  }
  func.func @transform_3(%arg0: i32, %arg1: i32) -> (i32, i32) {
    %c0_i32 = arith.constant 0 : i32
    %c0_i32_0 = arith.constant 0 : i32
    %c0_i32_1 = arith.constant 0 : i32
    return %c0_i32, %c0_i32_0 : i32, i32
  }
  func.func @transform_4(%arg0: i32, %arg1: i32) -> (i32, i32, i32, i32) {
    %c0_i32 = arith.constant 0 : i32
    %c0_i32_0 = arith.constant 0 : i32
    %c0_i32_1 = arith.constant 0 : i32
    %c0_i32_2 = arith.constant 0 : i32
    %c0_i32_3 = arith.constant 0 : i32
    return %c0_i32, %c0_i32_0, %c0_i32_1, %c0_i32_2 : i32, i32, i32, i32
  }
  func.func @transform_5(%arg0: i32, %arg1: i32) -> (i32, i32) {
    %c0_i32 = arith.constant 0 : i32
    %c0_i32_0 = arith.constant 0 : i32
    %c0_i32_1 = arith.constant 0 : i32
    return %c0_i32, %c0_i32_0 : i32, i32
  }
  func.func @transform_6(%arg0: i32, %arg1: i32) -> (i32, i32) {
    %c0_i32 = arith.constant 0 : i32
    %c0_i32_0 = arith.constant 0 : i32
    %c0_i32_1 = arith.constant 0 : i32
    return %c0_i32, %c0_i32_0 : i32, i32
  }
  func.func @transform_7(%arg0: i32, %arg1: i32) -> (i32, i32) {
    %c0_i32 = arith.constant 0 : i32
    %c0_i32_0 = arith.constant 0 : i32
    %c0_i32_1 = arith.constant 0 : i32
    return %c0_i32, %c0_i32_0 : i32, i32
  }
  func.func @transform_8(%arg0: i32, %arg1: i32) -> (i32, i32) {
    %c0_i32 = arith.constant 0 : i32
    %c0_i32_0 = arith.constant 0 : i32
    %c0_i32_1 = arith.constant 0 : i32
    return %c0_i32, %c0_i32_0 : i32, i32
  }
  func.func @transform_9(%arg0: i32, %arg1: i32) -> (i32, i32, i32, i32) {
    %c0_i32 = arith.constant 0 : i32
    %c0_i32_0 = arith.constant 0 : i32
    %c0_i32_1 = arith.constant 0 : i32
    return %arg0, %arg1, %c0_i32, %c0_i32_0 : i32, i32, i32, i32
  }
}

</mosaic_0001>

<llo_original>
// kernel: bottleneck_forward.1
$region0: #{bottleneck_forward.1}
  #allocation0 [shape = 'u32[]', space=smem, size = 0x4, offset = 0x4, fixed_abs, tag = 'smem constant byte address 0x4 - core index']
  #allocation1 [shape = 'u32[144,128]{1,0:T(1,128)}', space=vmem, size = 0x12000, scoped, tag = 'internal scratch']
  #allocation2 [shape = 'bf16[6,18,16]{2,1,0:T(8,128)(2,1)}', space=vmem, size = 0x9000, scoped, tag = 'scratch operand']
  %s0 = inlined_call_operand.hbm [shape: f32[2,16,16,64], index: 0, kind: input, shape index: {}, may-alias: {0,1,2}]
  %s1 = inlined_call_operand.hbm [shape: f32[2,16,16,64], index: 1, kind: input, shape index: {}, may-alias: {0,1,2}]
  %s2 = inlined_call_operand.hbm [shape: f32[2,16,16,64], index: 2, kind: input, shape index: {}, may-alias: {0,1,2}]
  %s3 = inlined_call_operand.vmem [shape: bf16[64,16], index: 3, kind: input, shape index: {}]
  %s4 = inlined_call_operand.vmem [shape: bf16[3,3,16,16], index: 4, kind: input, shape index: {}]
  %s5 = inlined_call_operand.vmem [shape: bf16[16,64], index: 5, kind: input, shape index: {}]
  %s6 = inlined_call_operand.vmem [shape: f32[1,16], index: 6, kind: input, shape index: {}]
  %s7 = inlined_call_operand.vmem [shape: f32[1,16], index: 7, kind: input, shape index: {}]
  %s8 = inlined_call_operand.vmem [shape: f32[1,64], index: 8, kind: input, shape index: {}]
  %s9 = inlined_call_operand.hbm [shape: f32[2,16,16,64], index: 9, kind: output, shape index: {}]
  %s10 = sld [smem:[#allocation0]]
  $region81: #{bottleneck_forward.1} parent=0
    _
  %s12 = ssub.s32 1, %s10
  %s13 = scalar_select 0, %s12, %s10
  $region1: #{bottleneck_forward.1} parent=0
    #allocation3 [shape = 'u8[65536]{0}', space=vmem, size = 0x10000, scoped, tag = 'input window, operand 0']
    #allocation4 [shape = 's32[2]{0}', space=sflag, size = 0x8, scoped, tag = 'scoped memory for bottleneck_forward.1']
    #allocation5 [shape = 's32[2]{0}', space=sflag, size = 0x8, scoped, tag = 'scoped memory for bottleneck_forward.1']
    #allocation6 [shape = 'u8[16384]{0}', space=vmem, size = 0x4000, scoped, tag = 'input window, operand 1']
    #allocation7 [shape = 's32[2]{0}', space=sflag, size = 0x8, scoped, tag = 'scoped memory for bottleneck_forward.1']
    #allocation8 [shape = 'u8[16384]{0}', space=vmem, size = 0x4000, scoped, tag = 'input window, operand 2']
    #allocation9 [shape = 'u8[65536]{0}', space=vmem, size = 0x10000, scoped, tag = 'output window, operand 0']
    %14 = vsyncpa [#allocation4], 0
    %s15 = scalar_lea.sflag [#allocation4], 1
    %16 = vsyncpa %s15, 0
    %17 = vsyncpa [#allocation7], 0
    %s18 = scalar_lea.sflag [#allocation7], 1
    %19 = vsyncpa %s18, 0
    %20 = vsyncpa [#allocation5], 0
    %s21 = scalar_lea.sflag [#allocation5], 1
    %22 = vsyncpa %s21, 0
    loop: start=0, step=1, limit=10
    $region2: #{bottleneck_forward.1} parent=1 // loop_pre_header
      _
    $region3: #{bottleneck_forward.1} parent=1 // loop_header
      %s24 = sphi 0, %s28
      %p25 = scmp.ge.s32.totalorder %s24, 10
      %s31 = sphi 0, %s43
      %s32 = sphi 0, %s39
      %s33 = sphi 0, %s31
      %s34 = sphi 0, %s32
      %s35 = sphi 0, %s33
      %s36 = sphi 0, %s34
      %s48 = sphi 0, %s50
      %s51 = sphi 0, %s48
      %s52 = sphi 0, %s51
      %s68 = sphi 0, %s52
      %s88 = sphi 0, %s90
      %s91 = sphi 0, %s88
      %s92 = sphi 0, %s91
      %s108 = sphi 0, %s92
      %s128 = sphi 0, %s130
      %s131 = sphi 0, %s128
      %s132 = sphi 0, %s131
      %s148 = sphi 0, %s132
      %s152 = sphi 0, %s152
      %s154 = sphi 0, %s152
      %s155 = sphi 0, %s154
      %s169 = sphi 0, %s155
      %s173 = sphi 0, %s173
      %s175 = sphi 0, %s173
      %s176 = sphi 0, %s175
      %s190 = sphi 0, %s176
      %s194 = sphi 0, %s194
      %s196 = sphi 0, %s194
      %s197 = sphi 0, %s196
      %s211 = sphi 0, %s197
      %s215 = sphi 0, %s215
      %s217 = sphi 0, %s215
      %s218 = sphi 0, %s217
      %s232 = sphi 0, %s218
      %s236 = sphi 0, %s236
      %s238 = sphi 0, %s236
      %s239 = sphi 0, %s238
      %s253 = sphi 0, %s239
      %s257 = sphi 0, %s257
      %s259 = sphi 0, %s257
      %s260 = sphi 0, %s259
      %s274 = sphi 0, %s260
      %s282 = sphi 0, %s284
      %s285 = sphi 0, %s282
      %s286 = sphi 0, %s285
      %s302 = sphi 0, %s286
    $region4: #{bottleneck_forward.1} parent=1 // loop_header_branch
      %27 = sbr.rel (%p25) target = $region8
    $region5: #{bottleneck_forward.1} parent=1 // loop_body
      %s29 = ssub.s32 %s24, 1
      %s30 = ssub.s32 %s24, 2
      %s37 = sadd.s32 1, %s32
      %p38 = scmp.ge.s32.totalorder %s37, 4
      %s39 = scalar_select %p38, 0, %s37
      %s40 = sadd.s32 1, %s31
      %s41 = scalar_select %p38, %s40, %s31
      %p42 = scmp.ge.s32.totalorder %s41, 2
      %s43 = scalar_select %p42, 0, %s41
      %s44 = ssub.s32 %s31, %s43
      %s45 = ssub.s32 %s32, %s39
      %s46 = sor.u32 %s44, %s45
      %p47 = scmp.eq.s32.totalorder %s46, 0
      %s49 = sadd.s32 %s48, 1
      %s50 = scalar_select %p47, %s48, %s49
      %p53 = pneg %p47
      %p54 = scmp.eq.s32.totalorder %s24, 7
      %p55 = por %p53, %p54
      %p56 = scmp.ne.s32.totalorder %s48, %s51
      %p57 = scmp.eq.s32.totalorder %s24, 0
      %p58 = por %p56, %p57
      %p59 = scmp.ne.s32.totalorder %s48, %s51
      %p60 = scmp.eq.s32.totalorder %s29, 7
      %p61 = por %p59, %p60
      %p62 = scmp.ne.s32.totalorder %s51, %s52
      %p63 = scmp.eq.s32.totalorder %s29, 0
      %p64 = por %p62, %p63
      %p65 = scmp.ne.s32.totalorder %s51, %s52
      %p66 = scmp.eq.s32.totalorder %s30, 7
      %p67 = por %p65, %p66
      %p69 = scmp.ne.s32.totalorder %s52, %s68
      %p70 = scmp.eq.s32.totalorder %s30, 0
      %p71 = por %p69, %p70
      %s72 = smul.u32 %s32, 4
      %s73 = ssub.s32 %s72, 1
      %p74 = scmp.gt.s32.totalorder %s73, 0
      %s75 = scalar_select %p74, %s73, 0
      %p76 = scmp.lt.s32.totalorder %s75, 15
      %s77 = scalar_select %p76, %s75, 15
      %s78 = smul.u32 %s39, 4
      %s79 = ssub.s32 %s78, 1
      %p80 = scmp.gt.s32.totalorder %s79, 0
      %s81 = scalar_select %p80, %s79, 0
      %p82 = scmp.lt.s32.totalorder %s81, 15
      %s83 = scalar_select %p82, %s81, 15
      %s84 = ssub.s32 %s31, %s43
      %s85 = ssub.s32 %s77, %s83
      %s86 = sor.u32 %s84, %s85
      %p87 = scmp.eq.s32.totalorder %s86, 0
      %s89 = sadd.s32 %s88, 1
      %s90 = scalar_select %p87, %s88, %s89
      %p93 = pneg %p87
      %p94 = scmp.eq.s32.totalorder %s24, 7
      %p95 = por %p93, %p94
      %p96 = scmp.ne.s32.totalorder %s88, %s91
      %p97 = scmp.eq.s32.totalorder %s24, 0
      %p98 = por %p96, %p97
      %p99 = scmp.ne.s32.totalorder %s88, %s91
      %p100 = scmp.eq.s32.totalorder %s29, 7
      %p101 = por %p99, %p100
      %p102 = scmp.ne.s32.totalorder %s91, %s92
      %p103 = scmp.eq.s32.totalorder %s29, 0
      %p104 = por %p102, %p103
      %p105 = scmp.ne.s32.totalorder %s91, %s92
      %p106 = scmp.eq.s32.totalorder %s30, 7
      %p107 = por %p105, %p106
      %p109 = scmp.ne.s32.totalorder %s92, %s108
      %p110 = scmp.eq.s32.totalorder %s30, 0
      %p111 = por %p109, %p110
      %s112 = sadd.s32 %s32, 1
      %s113 = smul.u32 %s112, 4
      %p114 = scmp.gt.s32.totalorder %s113, 0
      %s115 = scalar_select %p114, %s113, 0
      %p116 = scmp.lt.s32.totalorder %s115, 15
      %s117 = scalar_select %p116, %s115, 15
      %s118 = sadd.s32 %s39, 1
      %s119 = smul.u32 %s118, 4
      %p120 = scmp.gt.s32.totalorder %s119, 0
      %s121 = scalar_select %p120, %s119, 0
      %p122 = scmp.lt.s32.totalorder %s121, 15
      %s123 = scalar_select %p122, %s121, 15
      %s124 = ssub.s32 %s31, %s43
      %s125 = ssub.s32 %s117, %s123
      %s126 = sor.u32 %s124, %s125
      %p127 = scmp.eq.s32.totalorder %s126, 0
      %s129 = sadd.s32 %s128, 1
      %s130 = scalar_select %p127, %s128, %s129
      %p133 = pneg %p127
      %p134 = scmp.eq.s32.totalorder %s24, 7
      %p135 = por %p133, %p134
      %p136 = scmp.ne.s32.totalorder %s128, %s131
      %p137 = scmp.eq.s32.totalorder %s24, 0
      %p138 = por %p136, %p137
      %p139 = scmp.ne.s32.totalorder %s128, %s131
      %p140 = scmp.eq.s32.totalorder %s29, 7
      %p141 = por %p139, %p140
      %p142 = scmp.ne.s32.totalorder %s131, %s132
      %p143 = scmp.eq.s32.totalorder %s29, 0
      %p144 = por %p142, %p143
      %p145 = scmp.ne.s32.totalorder %s131, %s132
      %p146 = scmp.eq.s32.totalorder %s30, 7
      %p147 = por %p145, %p146
      %p149 = scmp.ne.s32.totalorder %s132, %s148
      %p150 = scmp.eq.s32.totalorder %s30, 0
      %p151 = por %p149, %p150
      %s153 = sadd.s32 %s152, 1
      %p156 = scmp.eq.s32.totalorder %s24, 7
      %p157 = scmp.ne.s32.totalorder %s152, %s154
      %p158 = scmp.eq.s32.totalorder %s24, 0
      %p159 = por %p157, %p158
      %p160 = scmp.ne.s32.totalorder %s152, %s154
      %p161 = scmp.eq.s32.totalorder %s29, 7
      %p162 = por %p160, %p161
      %p163 = scmp.ne.s32.totalorder %s154, %s155
      %p164 = scmp.eq.s32.totalorder %s29, 0
      %p165 = por %p163, %p164
      %p166 = scmp.ne.s32.totalorder %s154, %s155
      %p167 = scmp.eq.s32.totalorder %s30, 7
      %p168 = por %p166, %p167
      %p170 = scmp.ne.s32.totalorder %s155, %s169
      %p171 = scmp.eq.s32.totalorder %s30, 0
      %p172 = por %p170, %p171
      %s174 = sadd.s32 %s173, 1
      %p177 = scmp.eq.s32.totalorder %s24, 7
      %p178 = scmp.ne.s32.totalorder %s173, %s175
      %p179 = scmp.eq.s32.totalorder %s24, 0
      %p180 = por %p178, %p179
      %p181 = scmp.ne.s32.totalorder %s173, %s175
      %p182 = scmp.eq.s32.totalorder %s29, 7
      %p183 = por %p181, %p182
      %p184 = scmp.ne.s32.totalorder %s175, %s176
      %p185 = scmp.eq.s32.totalorder %s29, 0
      %p186 = por %p184, %p185
      %p187 = scmp.ne.s32.totalorder %s175, %s176
      %p188 = scmp.eq.s32.totalorder %s30, 7
      %p189 = por %p187, %p188
      %p191 = scmp.ne.s32.totalorder %s176, %s190
      %p192 = scmp.eq.s32.totalorder %s30, 0
      %p193 = por %p191, %p192
      %s195 = sadd.s32 %s194, 1
      %p198 = scmp.eq.s32.totalorder %s24, 7
      %p199 = scmp.ne.s32.totalorder %s194, %s196
      %p200 = scmp.eq.s32.totalorder %s24, 0
      %p201 = por %p199, %p200
      %p202 = scmp.ne.s32.totalorder %s194, %s196
      %p203 = scmp.eq.s32.totalorder %s29, 7
      %p204 = por %p202, %p203
      %p205 = scmp.ne.s32.totalorder %s196, %s197
      %p206 = scmp.eq.s32.totalorder %s29, 0
      %p207 = por %p205, %p206
      %p208 = scmp.ne.s32.totalorder %s196, %s197
      %p209 = scmp.eq.s32.totalorder %s30, 7
      %p210 = por %p208, %p209
      %p212 = scmp.ne.s32.totalorder %s197, %s211
      %p213 = scmp.eq.s32.totalorder %s30, 0
      %p214 = por %p212, %p213
      %s216 = sadd.s32 %s215, 1
      %p219 = scmp.eq.s32.totalorder %s24, 7
      %p220 = scmp.ne.s32.totalorder %s215, %s217
      %p221 = scmp.eq.s32.totalorder %s24, 0
      %p222 = por %p220, %p221
      %p223 = scmp.ne.s32.totalorder %s215, %s217
      %p224 = scmp.eq.s32.totalorder %s29, 7
      %p225 = por %p223, %p224
      %p226 = scmp.ne.s32.totalorder %s217, %s218
      %p227 = scmp.eq.s32.totalorder %s29, 0
      %p228 = por %p226, %p227
      %p229 = scmp.ne.s32.totalorder %s217, %s218
      %p230 = scmp.eq.s32.totalorder %s30, 7
      %p231 = por %p229, %p230
      %p233 = scmp.ne.s32.totalorder %s218, %s232
      %p234 = scmp.eq.s32.totalorder %s30, 0
      %p235 = por %p233, %p234
      %s237 = sadd.s32 %s236, 1
      %p240 = scmp.eq.s32.totalorder %s24, 7
      %p241 = scmp.ne.s32.totalorder %s236, %s238
      %p242 = scmp.eq.s32.totalorder %s24, 0
      %p243 = por %p241, %p242
      %p244 = scmp.ne.s32.totalorder %s236, %s238
      %p245 = scmp.eq.s32.totalorder %s29, 7
      %p246 = por %p244, %p245
      %p247 = scmp.ne.s32.totalorder %s238, %s239
      %p248 = scmp.eq.s32.totalorder %s29, 0
      %p249 = por %p247, %p248
      %p250 = scmp.ne.s32.totalorder %s238, %s239
      %p251 = scmp.eq.s32.totalorder %s30, 7
      %p252 = por %p250, %p251
      %p254 = scmp.ne.s32.totalorder %s239, %s253
      %p255 = scmp.eq.s32.totalorder %s30, 0
      %p256 = por %p254, %p255
      %s258 = sadd.s32 %s257, 1
      %p261 = scmp.eq.s32.totalorder %s24, 7
      %p262 = scmp.ne.s32.totalorder %s257, %s259
      %p263 = scmp.eq.s32.totalorder %s24, 0
      %p264 = por %p262, %p263
      %p265 = scmp.ne.s32.totalorder %s257, %s259
      %p266 = scmp.eq.s32.totalorder %s29, 7
      %p267 = por %p265, %p266
      %p268 = scmp.ne.s32.totalorder %s259, %s260
      %p269 = scmp.eq.s32.totalorder %s29, 0
      %p270 = por %p268, %p269
      %p271 = scmp.ne.s32.totalorder %s259, %s260
      %p272 = scmp.eq.s32.totalorder %s30, 7
      %p273 = por %p271, %p272
      %p275 = scmp.ne.s32.totalorder %s260, %s274
      %p276 = scmp.eq.s32.totalorder %s30, 0
      %p277 = por %p275, %p276
      %s278 = ssub.s32 %s31, %s43
      %s279 = ssub.s32 %s32, %s39
      %s280 = sor.u32 %s278, %s279
      %p281 = scmp.eq.s32.totalorder %s280, 0
      %s283 = sadd.s32 %s282, 1
      %s284 = scalar_select %p281, %s282, %s283
      %p287 = pneg %p281
      %p288 = scmp.eq.s32.totalorder %s24, 7
      %p289 = por %p287, %p288
      %p290 = scmp.ne.s32.totalorder %s282, %s285
      %p291 = scmp.eq.s32.totalorder %s24, 0
      %p292 = por %p290, %p291
      %p293 = scmp.ne.s32.totalorder %s282, %s285
      %p294 = scmp.eq.s32.totalorder %s29, 7
      %p295 = por %p293, %p294
      %p296 = scmp.ne.s32.totalorder %s285, %s286
      %p297 = scmp.eq.s32.totalorder %s29, 0
      %p298 = por %p296, %p297
      %p299 = scmp.ne.s32.totalorder %s285, %s286
      %p300 = scmp.eq.s32.totalorder %s30, 7
      %p301 = por %p299, %p300
      %p303 = scmp.ne.s32.totalorder %s286, %s302
      %p304 = scmp.eq.s32.totalorder %s30, 0
      %p305 = por %p303, %p304
      %p306 = scmp.le.s32.totalorder 1, %s24
      %p307 = scmp.lt.s32.totalorder %s24, 9
      %p308 = pnand %p306, %p307
      %p309 = pneg %p308
      // Predicated region
      $region9: #{bottleneck_forward.1} parent=5 // pred_check
        _
      $region10: #{bottleneck_forward.1} parent=5 // pred_check_branch
        %311 = sbr.rel (%p308) target = $region12
      $region11: #{bottleneck_forward.1} parent=5 // pred_region
        %s312 = ssub.s32 %s24, 1
        // Predicated region
        $region13: #{bottleneck_forward.1} parent=11 // pred_check
          %p313 = pneg %p165
        $region14: #{bottleneck_forward.1} parent=11 // pred_check_branch
          %315 = sbr.rel (%p313) target = $region16
        $region15: #{bottleneck_forward.1} parent=11 // pred_region
          _
        $region16: #{bottleneck_forward.1} parent=11 // pred_fallthru
          _
        // Predicated region
        $region17: #{bottleneck_forward.1} parent=11 // pred_check
          %p316 = pneg %p186
        $region18: #{bottleneck_forward.1} parent=11 // pred_check_branch
          %318 = sbr.rel (%p316) target = $region20
        $region19: #{bottleneck_forward.1} parent=11 // pred_region
          _
        $region20: #{bottleneck_forward.1} parent=11 // pred_fallthru
          _
        // Predicated region
        $region21: #{bottleneck_forward.1} parent=11 // pred_check
          %p319 = pneg %p207
        $region22: #{bottleneck_forward.1} parent=11 // pred_check_branch
          %321 = sbr.rel (%p319) target = $region24
        $region23: #{bottleneck_forward.1} parent=11 // pred_region
          _
        $region24: #{bottleneck_forward.1} parent=11 // pred_fallthru
          _
        // Predicated region
        $region25: #{bottleneck_forward.1} parent=11 // pred_check
          %p322 = pneg %p228
        $region26: #{bottleneck_forward.1} parent=11 // pred_check_branch
          %324 = sbr.rel (%p322) target = $region28
        $region27: #{bottleneck_forward.1} parent=11 // pred_region
          _
        $region28: #{bottleneck_forward.1} parent=11 // pred_fallthru
          _
        // Predicated region
        $region29: #{bottleneck_forward.1} parent=11 // pred_check
          %p325 = pneg %p249
        $region30: #{bottleneck_forward.1} parent=11 // pred_check_branch
          %327 = sbr.rel (%p325) target = $region32
        $region31: #{bottleneck_forward.1} parent=11 // pred_region
          _
        $region32: #{bottleneck_forward.1} parent=11 // pred_fallthru
          _
        // Predicated region
        $region33: #{bottleneck_forward.1} parent=11 // pred_check
          %p328 = pneg %p270
        $region34: #{bottleneck_forward.1} parent=11 // pred_check_branch
          %330 = sbr.rel (%p328) target = $region36
        $region35: #{bottleneck_forward.1} parent=11 // pred_region
          _
        $region36: #{bottleneck_forward.1} parent=11 // pred_fallthru
          _
      $region12: #{bottleneck_forward.1} parent=5 // pred_fallthru
        _
      %p331 = scmp.lt.s32.totalorder %s24, 8
      // Predicated region
      $region37: #{bottleneck_forward.1} parent=5 // pred_check
        %p332 = pneg %p331
      $region38: #{bottleneck_forward.1} parent=5 // pred_check_branch
        %334 = sbr.rel (%p332) target = $region40
      $region39: #{bottleneck_forward.1} parent=5 // pred_region
        // Predicated region
        $region41: #{bottleneck_forward.1} parent=39 // pred_check
          %p335 = pneg %p58
        $region42: #{bottleneck_forward.1} parent=39 // pred_check_branch
          %337 = sbr.rel (%p335) target = $region44
        $region43: #{bottleneck_forward.1} parent=39 // pred_region
          %s338 = sand.u32 %s48, 1
          %s339 = scalar_lea.sflag [#allocation4], %s338
          %s340 = sand.u32 %s48, 1
          %s341 = smul.addr %s340, 64
          %s342 = scalar_lea.vmem [#allocation3], %s341
          %s343 = smul.u32 4, %s32
          %s345 = ssub.s32 1024, 1024
          %346 = vsyncadd %s339, %s345
          %s347 = smul.addr %s343, 2
          %s348 = smul.addr %s31, 32
          %s349 = sadd.s32 %s347, %s348
          %s350 = smul.addr %s349, 128
          %s351 = scalar_lea.hbm %s0, %s350
          %s352 = sshll.u32 %s342, 4
          %s353 = int_to_ptr.vmem [resolvable:$true] %s352
          %358 = dma.hbm_to_vmem [thread:$0]  %s351, 1024, %s353, %s339, 128, 128, 8
        $region44: #{bottleneck_forward.1} parent=39 // pred_fallthru
          _
        // Predicated region
        $region45: #{bottleneck_forward.1} parent=39 // pred_check
          %p359 = pneg %p98
        $region46: #{bottleneck_forward.1} parent=39 // pred_check_branch
          %361 = sbr.rel (%p359) target = $region48
        $region47: #{bottleneck_forward.1} parent=39 // pred_region
          %s362 = sand.u32 %s24, 1
          %s363 = scalar_lea.sflag [#allocation7], %s362
          %s364 = sand.u32 %s88, 1
          %s365 = smul.addr %s364, 16
          %s366 = scalar_lea.vmem [#allocation6], %s365
          %s367 = smul.u32 %s32, 4
          %s368 = ssub.s32 %s367, 1
          %p369 = scmp.gt.s32.totalorder %s368, 0
          %s370 = scalar_select %p369, %s368, 0
          %p371 = scmp.lt.s32.totalorder %s370, 15
          %s372 = scalar_select %p371, %s370, 15
          %s374 = ssub.s32 256, 256
          %375 = vsyncadd %s363, %s374
          %s376 = smul.addr %s372, 2
          %s377 = smul.addr %s31, 32
          %s378 = sadd.s32 %s376, %s377
          %s379 = smul.addr %s378, 128
          %s380 = scalar_lea.hbm %s1, %s379
          %s381 = sshll.u32 %s366, 4
          %s382 = int_to_ptr.vmem [resolvable:$true] %s381
          %387 = dma.hbm_to_vmem [thread:$0]  %s380, 256, %s382, %s363, 128, 128, 8
        $region48: #{bottleneck_forward.1} parent=39 // pred_fallthru
          _
        // Predicated region
        $region49: #{bottleneck_forward.1} parent=39 // pred_check
          %p388 = pneg %p138
        $region50: #{bottleneck_forward.1} parent=39 // pred_check_branch
          %390 = sbr.rel (%p388) target = $region52
        $region51: #{bottleneck_forward.1} parent=39 // pred_region
          %s391 = sand.u32 %s24, 1
          %s392 = scalar_lea.sflag [#allocation7], %s391
          %s393 = sand.u32 %s128, 1
          %s394 = smul.addr %s393, 16
          %s395 = scalar_lea.vmem [#allocation8], %s394
          %s396 = sadd.s32 %s32, 1
          %s397 = smul.u32 %s396, 4
          %p398 = scmp.gt.s32.totalorder %s397, 0
          %s399 = scalar_select %p398, %s397, 0
          %p400 = scmp.lt.s32.totalorder %s399, 15
          %s401 = scalar_select %p400, %s399, 15
          %s403 = ssub.s32 256, 256
          %404 = vsyncadd %s392, %s403
          %s405 = smul.addr %s401, 2
          %s406 = smul.addr %s31, 32
          %s407 = sadd.s32 %s405, %s406
          %s408 = smul.addr %s407, 128
          %s409 = scalar_lea.hbm %s2, %s408
          %s410 = sshll.u32 %s395, 4
          %s411 = int_to_ptr.vmem [resolvable:$true] %s410
          %416 = dma.hbm_to_vmem [thread:$0]  %s409, 256, %s411, %s392, 128, 128, 8
        $region52: #{bottleneck_forward.1} parent=39 // pred_fallthru
          _
      $region40: #{bottleneck_forward.1} parent=5 // pred_fallthru
        _
      %p417 = scmp.le.s32.totalorder 1, %s24
      %p418 = scmp.lt.s32.totalorder %s24, 9
      %p419 = pnand %p417, %p418
      %p420 = pneg %p419
      // Predicated region
      $region53: #{bottleneck_forward.1} parent=5 // pred_check
        _
      $region54: #{bottleneck_forward.1} parent=5 // pred_check_branch
        %422 = sbr.rel (%p419) target = $region56
      $region55: #{bottleneck_forward.1} parent=5 // pred_region
        %s423 = ssub.s32 %s24, 1
        %s424 = sand.u32 %s51, 1
        %s425 = scalar_lea.sflag [#allocation4], %s424
        %s426 = sand.u32 %s51, 1
        %s427 = smul.addr %s426, 64
        %s428 = scalar_lea.vmem [#allocation3], %s427
        // Predicated region
        $region57: #{bottleneck_forward.1} parent=55 // pred_check
          %p429 = pneg %p64
        $region58: #{bottleneck_forward.1} parent=55 // pred_check_branch
          %431 = sbr.rel (%p429) target = $region60
        $region59: #{bottleneck_forward.1} parent=55 // pred_region
          %432 = dma.done %s425, 1024
        $region60: #{bottleneck_forward.1} parent=55 // pred_fallthru
          _
        %s433 = sand.u32 %s29, 1
        %s434 = scalar_lea.sflag [#allocation7], %s433
        %s435 = sand.u32 %s91, 1
        %s436 = smul.addr %s435, 16
        %s437 = scalar_lea.vmem [#allocation6], %s436
        // Predicated region
        $region61: #{bottleneck_forward.1} parent=55 // pred_check
          %p438 = pneg %p104
        $region62: #{bottleneck_forward.1} parent=55 // pred_check_branch
          %440 = sbr.rel (%p438) target = $region64
        $region63: #{bottleneck_forward.1} parent=55 // pred_region
          %441 = dma.done %s434, 256
        $region64: #{bottleneck_forward.1} parent=55 // pred_fallthru
          _
        %s442 = sand.u32 %s29, 1
        %s443 = scalar_lea.sflag [#allocation7], %s442
        %s444 = sand.u32 %s131, 1
        %s445 = smul.addr %s444, 16
        %s446 = scalar_lea.vmem [#allocation8], %s445
        // Predicated region
        $region65: #{bottleneck_forward.1} parent=55 // pred_check
          %p447 = pneg %p144
        $region66: #{bottleneck_forward.1} parent=55 // pred_check_branch
          %449 = sbr.rel (%p447) target = $region68
        $region67: #{bottleneck_forward.1} parent=55 // pred_region
          %450 = dma.done %s443, 256
        $region68: #{bottleneck_forward.1} parent=55 // pred_fallthru
          _
        %s451 = sand.u32 %s51, 1
        %s452 = scalar_lea.sflag [#allocation4], %s451
        %s453 = sand.u32 %s51, 1
        %s454 = smul.addr %s453, 64
        %s455 = scalar_lea.vmem [#allocation3], %s454
        %p456 = pneg %p64
        %p457 = pneg %p61
        %s458 = sand.u32 %s29, 1
        %s459 = scalar_lea.sflag [#allocation7], %s458
        %s460 = sand.u32 %s91, 1
        %s461 = smul.addr %s460, 16
        %s462 = scalar_lea.vmem [#allocation6], %s461
        %p463 = pneg %p104
        %p464 = pneg %p101
        %s465 = sand.u32 %s29, 1
        %s466 = scalar_lea.sflag [#allocation7], %s465
        %s467 = sand.u32 %s131, 1
        %s468 = smul.addr %s467, 16
        %s469 = scalar_lea.vmem [#allocation8], %s468
        %p470 = pneg %p144
        %p471 = pneg %p141
        %p472 = pneg %p165
        %p473 = pneg %p162
        %p474 = pneg %p186
        %p475 = pneg %p183
        %p476 = pneg %p207
        %p477 = pneg %p204
        %p478 = pneg %p228
        %p479 = pneg %p225
        %p480 = pneg %p249
        %p481 = pneg %p246
        %p482 = pneg %p270
        %p483 = pneg %p267
        %p484 = pneg %p298
        %p485 = pneg %p295
        %s486 = sand.u32 %s285, 1
        %s487 = scalar_lea.sflag [#allocation5], %s486
        %s488 = sand.u32 %s285, 1
        %s489 = smul.addr %s488, 64
        %s490 = scalar_lea.vmem [#allocation9], %s489
        %s491 = smul.u32 4, %s34
        %s492 = smul.u32 %s34, 4
        %s493 = ssub.s32 %s492, 1
        %p494 = scmp.gt.s32.totalorder %s493, 0
        %s495 = scalar_select %p494, %s493, 0
        %p496 = scmp.lt.s32.totalorder %s495, 15
        %s497 = scalar_select %p496, %s495, 15
        %s498 = sadd.s32 %s34, 1
        %s499 = smul.u32 %s498, 4
        %p500 = scmp.gt.s32.totalorder %s499, 0
        %s501 = scalar_select %p500, %s499, 0
        %p502 = scmp.lt.s32.totalorder %s501, 15
        %s503 = scalar_select %p502, %s501, 15
        %s504 = smul.u32 4, %s34
        %vm506 = vcmask 122880
        %vm507 = vsmask.f32 256
        %vm508 = vmand %vm506, %vm507
        %v509 = vld [vmem:[#allocation2] sm:$0x1]
        %v510 = vsel %vm508, 0, %v509
        %511 = vst [vmem:[#allocation2] sm:$0x1] %v510
        %v512 = vld [vmem:[#allocation2 + $0xc] sm:$0x1]
        %v513 = vsel %vm508, 0, %v512
        %514 = vst [vmem:[#allocation2 + $0xc] sm:$0x1] %v513
        %v515 = vld [vmem:[#allocation2 + $0x18] sm:$0x1]
        %v516 = vsel %vm508, 0, %v515
        %517 = vst [vmem:[#allocation2 + $0x18] sm:$0x1] %v516
        %v518 = vld [vmem:[#allocation2 + $0x24] sm:$0x1]
        %v519 = vsel %vm508, 0, %v518
        %520 = vst [vmem:[#allocation2 + $0x24] sm:$0x1] %v519
        %v521 = vld [vmem:[#allocation2 + $0x30] sm:$0x1]
        %v522 = vsel %vm508, 0, %v521
        %523 = vst [vmem:[#allocation2 + $0x30] sm:$0x1] %v522
        %v524 = vld [vmem:[#allocation2 + $0x3c] sm:$0x1]
        %v525 = vsel %vm508, 0, %v524
        %526 = vst [vmem:[#allocation2 + $0x3c] sm:$0x1] %v525
        %vm527 = vsmask.f32 7938
        %vm528 = vmand %vm506, %vm527
        %v529 = vld [vmem:[#allocation2 + $0x8] sm:$0x1]
        %v530 = vsel %vm528, 0, %v529
        %531 = vst [vmem:[#allocation2 + $0x8] sm:$0x1] %v530
        %v532 = vld [vmem:[#allocation2 + $0x14] sm:$0x1]
        %v533 = vsel %vm528, 0, %v532
        %534 = vst [vmem:[#allocation2 + $0x14] sm:$0x1] %v533
        %v535 = vld [vmem:[#allocation2 + $0x20] sm:$0x1]
        %v536 = vsel %vm528, 0, %v535
        %537 = vst [vmem:[#allocation2 + $0x20] sm:$0x1] %v536
        %v538 = vld [vmem:[#allocation2 + $0x2c] sm:$0x1]
        %v539 = vsel %vm528, 0, %v538
        %540 = vst [vmem:[#allocation2 + $0x2c] sm:$0x1] %v539
        %v541 = vld [vmem:[#allocation2 + $0x38] sm:$0x1]
        %v542 = vsel %vm528, 0, %v541
        %543 = vst [vmem:[#allocation2 + $0x38] sm:$0x1] %v542
        %v544 = vld [vmem:[#allocation2 + $0x44] sm:$0x1]
        %v545 = vsel %vm528, 0, %v544
        %546 = vst [vmem:[#allocation2 + $0x44] sm:$0x1] %v545
        %v547 = vld [vmem:[%s428] sm:$0xff]
        %v548 = vld [vmem:[%s428 + $0x8] sm:$0xff]
        %v549 = vld [vmem:[%s428 + $0x10] sm:$0xff]
        %v550 = vld [vmem:[%s428 + $0x18] sm:$0xff]
        %v551 = vld [vmem:[%s428 + $0x20] sm:$0xff]
        %v552 = vld [vmem:[%s428 + $0x28] sm:$0xff]
        %v553 = vld [vmem:[%s428 + $0x30] sm:$0xff]
        %v554 = vld [vmem:[%s428 + $0x38] sm:$0xff]
        %v555 = vpack.c.bf16 %v548, %v547
        %v556 = vpack.c.bf16 %v550, %v549
        %v557 = vpack.c.bf16 %v552, %v551
        %v558 = vpack.c.bf16 %v554, %v553
        %v559 = vld [vmem:[%s3] sm:$0xf]
        %v560 = vld [vmem:[%s3 + $0x4] sm:$0xf]
        %v561 = vld [vmem:[%s3 + $0x8] sm:$0xf]
        %v562 = vld [vmem:[%s3 + $0xc] sm:$0xf]
        %v563 = vld [vmem:[%s3 + $0x10] sm:$0xf]
        %v564 = vld [vmem:[%s3 + $0x14] sm:$0xf]
        %v565 = vld [vmem:[%s3 + $0x18] sm:$0xf]
        %v566 = vld [vmem:[%s3 + $0x1c] sm:$0xf]
        %v567 = vld [vmem:[%s6] sm:$0x1]
        %v569 = vlaneseq
        %v570 = vshrl.u32 %v569, 7
        %v571 = vsub.s32 0, %v570
        %v572 = vrot.slane %v567, %v571
        %v582 = vunpack.c.l.b16 %v559
        %v583 = vunpack.c.l.b16 %v560
        %v584 = vunpack.c.l.b16 %v561
        %v585 = vunpack.c.l.b16 %v562
        %v586 = vunpack.c.l.b16 %v563
        %v587 = vunpack.c.l.b16 %v564
        %v588 = vunpack.c.l.b16 %v565
        %v589 = vunpack.c.l.b16 %v566
        %v590 = vpack.c.b16 %v583, %v582
        %v591 = vpack.c.b16 %v585, %v584
        %v592 = vpack.c.b16 %v587, %v586
        %v593 = vpack.c.b16 %v589, %v588
        %vm598 = vcmask 523264
        %v600 = vsel %vm598, %v555, 0
        %v603 = vsel %vm598, %v556, 0
        %v606 = vsel %vm598, %v557, 0
        %v609 = vsel %vm598, %v558, 0
        %611 = vmatprep.subr.bf16.mxu0 0
        %612 = vmatpush1.bf16.msra.mxu0 %v590
        %613 = vmatprep.subr.bf16.mxu0 0
        %614 = vmatpush1.bf16.msra.mxu0 %v591
        %615 = vmatprep.subr.bf16.mxu0 0
        %616 = vmatpush1.bf16.msra.mxu0 %v592
        %617 = vmatprep.subr.bf16.mxu0 0
        %618 = vmatpush1.bf16.msra.mxu0 %v593
        %619 = vmatprep.subr.bf16.mxu0 0
        %620 = vmatpush1.bf16.msra.mxu0 0
        %621 = vmatprep.subr.bf16.mxu0 0
        %622 = vmatpush1.bf16.msra.mxu0 0
        %623 = vmatprep.subr.bf16.mxu0 0
        %624 = vmatpush1.bf16.msra.mxu0 0
        %625 = vmatprep.subr.bf16.mxu0 0
        %626 = vmatpush1.bf16.msra.mxu0 0
        %627 = vmatprep.subr.bf16.mxu0 0
        %628 = vmatpush1.bf16.msra.mxu0 0
        %629 = vmatprep.subr.bf16.mxu0 0
        %630 = vmatpush1.bf16.msra.mxu0 0
        %631 = vmatprep.subr.bf16.mxu0 0
        %632 = vmatpush1.bf16.msra.mxu0 0
        %633 = vmatprep.subr.bf16.mxu0 0
        %634 = vmatpush1.bf16.msra.mxu0 0
        %635 = vmatprep.subr.bf16.mxu0 0
        %636 = vmatpush1.bf16.msra.mxu0 0
        %637 = vmatprep.subr.bf16.mxu0 0
        %638 = vmatpush1.bf16.msra.mxu0 0
        %639 = vmatprep.subr.bf16.mxu0 0
        %640 = vmatpush1.bf16.msra.mxu0 0
        %641 = vmatprep.subr.bf16.mxu0 0
        %642 = vmatpush1.bf16.msra.mxu0 0
        %643 = vmatprep.mubr.bf16.mxu0 0
        %644 = vmatmul.mubr.bf16.gmra.mrb[0].mxu0 %v600
        %v645 = vpop.f32.mrb[0].mxu0
        %v646 = vadd.f32 %v572, %v645
        %v647 = vpop.f32.mrb[0].mxu0
        %v648 = vpop.f32.mrb[0].mxu0
        %v649 = vadd.f32 %v572, %v648
        %v650 = vpop.f32.mrb[0].mxu0
        %651 = vmatprep.mubr.bf16.mxu0 0
        %652 = vmatmul.mubr.bf16.gmra.mrb[0].mxu0 %v603
        %v653 = vpop.f32.mrb[0].mxu0
        %v654 = vadd.f32 %v572, %v653
        %v655 = vpop.f32.mrb[0].mxu0
        %v656 = vpop.f32.mrb[0].mxu0
        %v657 = vadd.f32 %v572, %v656
        %v658 = vpop.f32.mrb[0].mxu0
        %659 = vmatprep.mubr.bf16.mxu0 0
        %660 = vmatmul.mubr.bf16.gmra.mrb[0].mxu0 %v606
        %v661 = vpop.f32.mrb[0].mxu0
        %v662 = vadd.f32 %v572, %v661
        %v663 = vpop.f32.mrb[0].mxu0
        %v664 = vpop.f32.mrb[0].mxu0
        %v665 = vadd.f32 %v572, %v664
        %v666 = vpop.f32.mrb[0].mxu0
        %667 = vmatprep.mubr.bf16.mxu0 0
        %668 = vmatmul.mubr.bf16.gmra.mrb[0].mxu0 %v609
        %v669 = vpop.f32.mrb[0].mxu0
        %v670 = vadd.f32 %v572, %v669
        %v671 = vpop.f32.mrb[0].mxu0
        %v672 = vpop.f32.mrb[0].mxu0
        %v673 = vadd.f32 %v572, %v672
        %v674 = vpop.f32.mrb[0].mxu0
        %675 = vdwg.mxu0
        %v676 = vmax.f32 %v646, 0.0
        %v677 = vmax.f32 %v649, 0.0
        %v678 = vmax.f32 %v654, 0.0
        %v679 = vmax.f32 %v657, 0.0
        %v680 = vmax.f32 %v662, 0.0
        %v681 = vmax.f32 %v665, 0.0
        %v682 = vmax.f32 %v670, 0.0
        %v683 = vmax.f32 %v673, 0.0
        %v684 = vpack.c.bf16 %v677, %v676
        %v685 = vpack.c.bf16 %v679, %v678
        %v686 = vpack.c.bf16 %v681, %v680
        %v687 = vpack.c.bf16 %v683, %v682
        %v692 = vunpack.c.l.b16 %v684
        %v693 = vunpack.c.h.b16 %v684
        %v694 = vunpack.c.l.b16 %v685
        %v695 = vunpack.c.h.b16 %v685
        %v696 = vunpack.c.l.b16 %v686
        %v697 = vunpack.c.h.b16 %v686
        %v698 = vunpack.c.l.b16 %v687
        %v699 = vunpack.c.h.b16 %v687
        %v700 = vpack.c.b16 %v692, %v692
        %v701 = vpack.c.b16 %v693, %v693
        %v702 = vpack.c.b16 %v694, %v694
        %v703 = vpack.c.b16 %v695, %v695
        %v704 = vpack.c.b16 %v696, %v696
        %v705 = vpack.c.b16 %v697, %v697
        %v706 = vpack.c.b16 %v698, %v698
        %v707 = vpack.c.b16 %v699, %v699
        %vm708 = vsmask.f32 4368
        %vm709 = vmor %vm507, %vm708
        %v711 = vshrl.u32 %v700, 16
        %v713 = vrot.slane %v711, 7
        %v714 = vshll.u32 %v700, 16
        %v716 = vor.u32 %v713, %v714
        %v717 = vrot.slane %v713, 4
        %v719 = vshrl.u32 %v701, 16
        %v721 = vrot.slane %v719, 7
        %v722 = vshll.u32 %v701, 16
        %v724 = vor.u32 %v721, %v722
        %v725 = vsel %vm709, %v717, %v724
        %v726 = vrot.slane %v721, 4
        %v728 = vshrl.u32 %v702, 16
        %v730 = vrot.slane %v728, 7
        %v731 = vshll.u32 %v702, 16
        %v733 = vor.u32 %v730, %v731
        %v734 = vrot.slane %v730, 4
        %v736 = vshrl.u32 %v703, 16
        %v738 = vrot.slane %v736, 7
        %v739 = vshll.u32 %v703, 16
        %v741 = vor.u32 %v738, %v739
        %v742 = vsel %vm709, %v734, %v741
        %v743 = vrot.slane %v738, 4
        %v745 = vshrl.u32 %v704, 16
        %v747 = vrot.slane %v745, 7
        %v748 = vshll.u32 %v704, 16
        %v750 = vor.u32 %v747, %v748
        %v751 = vrot.slane %v747, 4
        %v753 = vshrl.u32 %v705, 16
        %v755 = vrot.slane %v753, 7
        %v756 = vshll.u32 %v705, 16
        %v758 = vor.u32 %v755, %v756
        %v759 = vsel %vm709, %v751, %v758
        %v760 = vrot.slane %v755, 4
        %v762 = vshrl.u32 %v706, 16
        %v764 = vrot.slane %v762, 7
        %v765 = vshll.u32 %v706, 16
        %v767 = vor.u32 %v764, %v765
        %v768 = vrot.slane %v764, 4
        %v770 = vshrl.u32 %v707, 16
        %v772 = vrot.slane %v770, 7
        %v773 = vshll.u32 %v707, 16
        %v775 = vor.u32 %v772, %v773
        %v776 = vsel %vm709, %v768, %v775
        %v777 = vrot.slane %v772, 4
        %s790 = scalar_lea.vmem [#allocation2], 12
        %vm791 = vcmask 125952
        %vm792 = vmand %vm791, %vm527
        %v793 = vld [vmem:[%s790] sm:$0xf]
        %v794 = vsel %vm792, %v716, %v793
        %795 = vst [vmem:[%s790] sm:$0xf] %v794
        %vm796 = vcmask 125952
        %797 = vst.msk [vmem:[%s790 + $0x4] sm:$0xf] %vm796, %v725
        %v798 = vld [vmem:[%s790 + $0x8] sm:$0x1]
        %v799 = vsel %vm508, %v726, %v798
        %800 = vst [vmem:[%s790 + $0x8] sm:$0x1] %v799
        %v801 = vld [vmem:[%s790 + $0xc] sm:$0xf]
        %v802 = vsel %vm792, %v733, %v801
        %803 = vst [vmem:[%s790 + $0xc] sm:$0xf] %v802
        %804 = vst.msk [vmem:[%s790 + $0x10] sm:$0xf] %vm796, %v742
        %v805 = vld [vmem:[%s790 + $0x14] sm:$0x1]
        %v806 = vsel %vm508, %v743, %v805
        %807 = vst [vmem:[%s790 + $0x14] sm:$0x1] %v806
        %v808 = vld [vmem:[%s790 + $0x18] sm:$0xf]
        %v809 = vsel %vm792, %v750, %v808
        %810 = vst [vmem:[%s790 + $0x18] sm:$0xf] %v809
        %811 = vst.msk [vmem:[%s790 + $0x1c] sm:$0xf] %vm796, %v759
        %v812 = vld [vmem:[%s790 + $0x20] sm:$0x1]
        %v813 = vsel %vm508, %v760, %v812
        %814 = vst [vmem:[%s790 + $0x20] sm:$0x1] %v813
        %v815 = vld [vmem:[%s790 + $0x24] sm:$0xf]
        %v816 = vsel %vm792, %v767, %v815
        %817 = vst [vmem:[%s790 + $0x24] sm:$0xf] %v816
        %818 = vst.msk [vmem:[%s790 + $0x28] sm:$0xf] %vm796, %v776
        %v819 = vld [vmem:[%s790 + $0x2c] sm:$0x1]
        %v820 = vsel %vm508, %v777, %v819
        %821 = vst [vmem:[%s790 + $0x2c] sm:$0x1] %v820
        %v822 = vld [vmem:[%s437] sm:$0xff]
        %v823 = vld [vmem:[%s437 + $0x8] sm:$0xff]
        %v824 = vpack.c.bf16 %v823, %v822
        %v825 = vld [vmem:[%s3] sm:$0xf]
        %v826 = vld [vmem:[%s3 + $0x4] sm:$0xf]
        %v827 = vld [vmem:[%s3 + $0x8] sm:$0xf]
        %v828 = vld [vmem:[%s3 + $0xc] sm:$0xf]
        %v829 = vld [vmem:[%s3 + $0x10] sm:$0xf]
        %v830 = vld [vmem:[%s3 + $0x14] sm:$0xf]
        %v831 = vld [vmem:[%s3 + $0x18] sm:$0xf]
        %v832 = vld [vmem:[%s3 + $0x1c] sm:$0xf]
        %v833 = vld [vmem:[%s6] sm:$0x1]
        %v835 = vlaneseq
        %v836 = vshrl.u32 %v835, 7
        %v837 = vsub.s32 0, %v836
        %v838 = vrot.slane %v833, %v837
        %v848 = vunpack.c.l.b16 %v825
        %v849 = vunpack.c.l.b16 %v826
        %v850 = vunpack.c.l.b16 %v827
        %v851 = vunpack.c.l.b16 %v828
        %v852 = vunpack.c.l.b16 %v829
        %v853 = vunpack.c.l.b16 %v830
        %v854 = vunpack.c.l.b16 %v831
        %v855 = vunpack.c.l.b16 %v832
        %v856 = vpack.c.b16 %v849, %v848
        %v857 = vpack.c.b16 %v851, %v850
        %v858 = vpack.c.b16 %v853, %v852
        %v859 = vpack.c.b16 %v855, %v854
        %v865 = vsel %vm598, %v824, 0
        %867 = vmatprep.subr.bf16.mxu0 0
        %868 = vmatpush1.bf16.msra.mxu0 %v856
        %869 = vmatprep.subr.bf16.mxu0 0
        %870 = vmatpush1.bf16.msra.mxu0 %v857
        %871 = vmatprep.subr.bf16.mxu0 0
        %872 = vmatpush1.bf16.msra.mxu0 %v858
        %873 = vmatprep.subr.bf16.mxu0 0
        %874 = vmatpush1.bf16.msra.mxu0 %v859
        %875 = vmatprep.subr.bf16.mxu0 0
        %876 = vmatpush1.bf16.msra.mxu0 0
        %877 = vmatprep.subr.bf16.mxu0 0
        %878 = vmatpush1.bf16.msra.mxu0 0
        %879 = vmatprep.subr.bf16.mxu0 0
        %880 = vmatpush1.bf16.msra.mxu0 0
        %881 = vmatprep.subr.bf16.mxu0 0
        %882 = vmatpush1.bf16.msra.mxu0 0
        %883 = vmatprep.subr.bf16.mxu0 0
        %884 = vmatpush1.bf16.msra.mxu0 0
        %885 = vmatprep.subr.bf16.mxu0 0
        %886 = vmatpush1.bf16.msra.mxu0 0
        %887 = vmatprep.subr.bf16.mxu0 0
        %888 = vmatpush1.bf16.msra.mxu0 0
        %889 = vmatprep.subr.bf16.mxu0 0
        %890 = vmatpush1.bf16.msra.mxu0 0
        %891 = vmatprep.subr.bf16.mxu0 0
        %892 = vmatpush1.bf16.msra.mxu0 0
        %893 = vmatprep.subr.bf16.mxu0 0
        %894 = vmatpush1.bf16.msra.mxu0 0
        %895 = vmatprep.subr.bf16.mxu0 0
        %896 = vmatpush1.bf16.msra.mxu0 0
        %897 = vmatprep.subr.bf16.mxu0 0
        %898 = vmatpush1.bf16.msra.mxu0 0
        %899 = vmatprep.mubr.bf16.mxu0 0
        %900 = vmatmul.mubr.bf16.gmra.mrb[0].mxu0 %v865
        %v901 = vpop.f32.mrb[0].mxu0
        %v902 = vadd.f32 %v838, %v901
        %v903 = vpop.f32.mrb[0].mxu0
        %v904 = vpop.f32.mrb[0].mxu0
        %v905 = vadd.f32 %v838, %v904
        %v906 = vpop.f32.mrb[0].mxu0
        %907 = vdwg.mxu0
        %v908 = vmax.f32 %v902, 0.0
        %v909 = vmax.f32 %v905, 0.0
        %p910 = scmp.gt.s32.totalorder %s34, 0
        %s911 = scalar_select %p910, 1, 0
        %v912 = vstv %s911
        %vm913 = vcmp.eq.s32.totalorder %v912, 1
        %v914 = vsel %vm913, %v908, 0.0
        %v915 = vsel %vm913, %v909, 0.0
        %v916 = vpack.c.bf16 %v915, %v914
        %v918 = vunpack.c.l.b16 %v916
        %v919 = vunpack.c.h.b16 %v916
        %v920 = vpack.c.b16 %v918, %v918
        %v921 = vpack.c.b16 %v919, %v919
        %v923 = vshrl.u32 %v920, 16
        %v925 = vrot.slane %v923, 7
        %v926 = vshll.u32 %v920, 16
        %v928 = vor.u32 %v925, %v926
        %v929 = vrot.slane %v925, 4
        %v931 = vshrl.u32 %v921, 16
        %v933 = vrot.slane %v931, 7
        %v934 = vshll.u32 %v921, 16
        %v936 = vor.u32 %v933, %v934
        %v937 = vsel %vm709, %v929, %v936
        %v938 = vrot.slane %v933, 4
        %v942 = vld [vmem:[#allocation2] sm:$0xf]
        %v943 = vsel %vm792, %v928, %v942
        %944 = vst [vmem:[#allocation2] sm:$0xf] %v943
        %945 = vst.msk [vmem:[#allocation2 + $0x4] sm:$0xf] %vm796, %v937
        %v946 = vld [vmem:[#allocation2 + $0x8] sm:$0x1]
        %v947 = vsel %vm508, %v938, %v946
        %948 = vst [vmem:[#allocation2 + $0x8] sm:$0x1] %v947
        %v949 = vld [vmem:[%s446] sm:$0xff]
        %v950 = vld [vmem:[%s446 + $0x8] sm:$0xff]
        %v951 = vpack.c.bf16 %v950, %v949
        %v952 = vld [vmem:[%s3] sm:$0xf]
        %v953 = vld [vmem:[%s3 + $0x4] sm:$0xf]
        %v954 = vld [vmem:[%s3 + $0x8] sm:$0xf]
        %v955 = vld [vmem:[%s3 + $0xc] sm:$0xf]
        %v956 = vld [vmem:[%s3 + $0x10] sm:$0xf]
        %v957 = vld [vmem:[%s3 + $0x14] sm:$0xf]
        %v958 = vld [vmem:[%s3 + $0x18] sm:$0xf]
        %v959 = vld [vmem:[%s3 + $0x1c] sm:$0xf]
        %v960 = vld [vmem:[%s6] sm:$0x1]
        %v962 = vlaneseq
        %v963 = vshrl.u32 %v962, 7
        %v964 = vsub.s32 0, %v963
        %v965 = vrot.slane %v960, %v964
        %v975 = vunpack.c.l.b16 %v952
        %v976 = vunpack.c.l.b16 %v953
        %v977 = vunpack.c.l.b16 %v954
        %v978 = vunpack.c.l.b16 %v955
        %v979 = vunpack.c.l.b16 %v956
        %v980 = vunpack.c.l.b16 %v957
        %v981 = vunpack.c.l.b16 %v958
        %v982 = vunpack.c.l.b16 %v959
        %v983 = vpack.c.b16 %v976, %v975
        %v984 = vpack.c.b16 %v978, %v977
        %v985 = vpack.c.b16 %v980, %v979
        %v986 = vpack.c.b16 %v982, %v981
        %v992 = vsel %vm598, %v951, 0
        %994 = vmatprep.subr.bf16.mxu0 0
        %995 = vmatpush1.bf16.msra.mxu0 %v983
        %996 = vmatprep.subr.bf16.mxu0 0
        %997 = vmatpush1.bf16.msra.mxu0 %v984
        %998 = vmatprep.subr.bf16.mxu0 0
        %999 = vmatpush1.bf16.msra.mxu0 %v985
        %1000 = vmatprep.subr.bf16.mxu0 0
        %1001 = vmatpush1.bf16.msra.mxu0 %v986
        %1002 = vmatprep.subr.bf16.mxu0 0
        %1003 = vmatpush1.bf16.msra.mxu0 0
        %1004 = vmatprep.subr.bf16.mxu0 0
        %1005 = vmatpush1.bf16.msra.mxu0 0
        %1006 = vmatprep.subr.bf16.mxu0 0
        %1007 = vmatpush1.bf16.msra.mxu0 0
        %1008 = vmatprep.subr.bf16.mxu0 0
        %1009 = vmatpush1.bf16.msra.mxu0 0
        %1010 = vmatprep.subr.bf16.mxu0 0
        %1011 = vmatpush1.bf16.msra.mxu0 0
        %1012 = vmatprep.subr.bf16.mxu0 0
        %1013 = vmatpush1.bf16.msra.mxu0 0
        %1014 = vmatprep.subr.bf16.mxu0 0
        %1015 = vmatpush1.bf16.msra.mxu0 0
        %1016 = vmatprep.subr.bf16.mxu0 0
        %1017 = vmatpush1.bf16.msra.mxu0 0
        %1018 = vmatprep.subr.bf16.mxu0 0
        %1019 = vmatpush1.bf16.msra.mxu0 0
        %1020 = vmatprep.subr.bf16.mxu0 0
        %1021 = vmatpush1.bf16.msra.mxu0 0
        %1022 = vmatprep.subr.bf16.mxu0 0
        %1023 = vmatpush1.bf16.msra.mxu0 0
        %1024 = vmatprep.subr.bf16.mxu0 0
        %1025 = vmatpush1.bf16.msra.mxu0 0
        %1026 = vmatprep.mubr.bf16.mxu0 0
        %1027 = vmatmul.mubr.bf16.gmra.mrb[0].mxu0 %v992
        %v1028 = vpop.f32.mrb[0].mxu0
        %v1029 = vadd.f32 %v965, %v1028
        %v1030 = vpop.f32.mrb[0].mxu0
        %v1031 = vpop.f32.mrb[0].mxu0
        %v1032 = vadd.f32 %v965, %v1031
        %v1033 = vpop.f32.mrb[0].mxu0
        %1034 = vdwg.mxu0
        %v1035 = vmax.f32 %v1029, 0.0
        %v1036 = vmax.f32 %v1032, 0.0
        %p1037 = scmp.lt.s32.totalorder %s34, 3
        %s1038 = scalar_select %p1037, 1, 0
        %v1039 = vstv %s1038
        %vm1040 = vcmp.eq.s32.totalorder %v1039, 1
        %v1041 = vsel %vm1040, %v1035, 0.0
        %v1042 = vsel %vm1040, %v1036, 0.0
        %v1043 = vpack.c.bf16 %v1042, %v1041
        %v1045 = vunpack.c.l.b16 %v1043
        %v1046 = vunpack.c.h.b16 %v1043
        %v1047 = vpack.c.b16 %v1045, %v1045
        %v1048 = vpack.c.b16 %v1046, %v1046
        %v1050 = vshrl.u32 %v1047, 16
        %v1052 = vrot.slane %v1050, 7
        %v1053 = vshll.u32 %v1047, 16
        %v1055 = vor.u32 %v1052, %v1053
        %v1056 = vrot.slane %v1052, 4
        %v1058 = vshrl.u32 %v1048, 16
        %v1060 = vrot.slane %v1058, 7
        %v1061 = vshll.u32 %v1048, 16
        %v1063 = vor.u32 %v1060, %v1061
        %v1064 = vsel %vm709, %v1056, %v1063
        %v1065 = vrot.slane %v1060, 4
        %s1069 = scalar_lea.vmem [#allocation2], 60
        %v1070 = vld [vmem:[%s1069] sm:$0xf]
        %v1071 = vsel %vm792, %v1055, %v1070
        %1072 = vst [vmem:[%s1069] sm:$0xf] %v1071
        %1073 = vst.msk [vmem:[%s1069 + $0x4] sm:$0xf] %vm796, %v1064
        %v1074 = vld [vmem:[%s1069 + $0x8] sm:$0x1]
        %v1075 = vsel %vm508, %v1065, %v1074
        %1076 = vst [vmem:[%s1069 + $0x8] sm:$0x1] %v1075
        %v1077 = vld [vmem:[#allocation2] sm:$0xf]
        %v1078 = vld [vmem:[#allocation2 + $0x4] sm:$0xf]
        %v1079 = vld [vmem:[#allocation2 + $0xc] sm:$0xf]
        %v1080 = vld [vmem:[#allocation2 + $0x10] sm:$0xf]
        %v1081 = vld [vmem:[#allocation2 + $0x18] sm:$0xf]
        %v1082 = vld [vmem:[#allocation2 + $0x1c] sm:$0xf]
        %v1083 = vld [vmem:[#allocation2 + $0x24] sm:$0xf]
        %v1084 = vld [vmem:[#allocation2 + $0x28] sm:$0xf]
        %v1085 = vld [vmem:[%s4] sm:$0xf]
        %v1086 = vld [vmem:[%s4 + $0x4] sm:$0xf]
        %v1087 = vld [vmem:[#allocation2 + $0x8] sm:$0x1]
        %v1088 = vld [vmem:[#allocation2 + $0x14] sm:$0x1]
        %v1089 = vld [vmem:[#allocation2 + $0x20] sm:$0x1]
        %v1090 = vld [vmem:[#allocation2 + $0x2c] sm:$0x1]
        %vm1091 = vsmask.f32 3328
        %vm1092 = vsmask.f32 7440
        %vm1093 = vmor %vm1091, %vm1092
        %v1095 = vshrl.u32 %v1077, 16
        %v1097 = vrot.slane %v1095, 4
        %v1098 = vshll.u32 %v1077, 16
        %v1100 = vrot.slane %v1098, 5
        %v1101 = vor.u32 %v1097, %v1100
        %v1102 = vrot.slane %v1101, 4
        %v1104 = vshll.u32 %v1078, 16
        %v1106 = vrot.slane %v1104, 5
        %v1107 = vsel %vm1093, %v1102, %v1106
        %v1108 = vshrl.u32 %v1078, 16
        %v1110 = vrot.slane %v1108, 4
        %v1111 = vor.u32 %v1110, %v1106
        %v1112 = vrot.slane %v1111, 4
        %v1114 = vshll.u32 %v1087, 16
        %v1116 = vrot.slane %v1114, 5
        %v1117 = vsel %vm1093, %v1112, %v1116
        %v1119 = vshrl.u32 %v1079, 16
        %v1121 = vrot.slane %v1119, 4
        %v1122 = vshll.u32 %v1079, 16
        %v1124 = vrot.slane %v1122, 5
        %v1125 = vor.u32 %v1121, %v1124
        %v1126 = vrot.slane %v1125, 4
        %v1128 = vshll.u32 %v1080, 16
        %v1130 = vrot.slane %v1128, 5
        %v1131 = vsel %vm1093, %v1126, %v1130
        %v1132 = vshrl.u32 %v1080, 16
        %v1134 = vrot.slane %v1132, 4
        %v1135 = vor.u32 %v1134, %v1130
        %v1136 = vrot.slane %v1135, 4
        %v1138 = vshll.u32 %v1088, 16
        %v1140 = vrot.slane %v1138, 5
        %v1141 = vsel %vm1093, %v1136, %v1140
        %v1143 = vshrl.u32 %v1081, 16
        %v1145 = vrot.slane %v1143, 4
        %v1146 = vshll.u32 %v1081, 16
        %v1148 = vrot.slane %v1146, 5
        %v1149 = vor.u32 %v1145, %v1148
        %v1150 = vrot.slane %v1149, 4
        %v1152 = vshll.u32 %v1082, 16
        %v1154 = vrot.slane %v1152, 5
        %v1155 = vsel %vm1093, %v1150, %v1154
        %v1156 = vshrl.u32 %v1082, 16
        %v1158 = vrot.slane %v1156, 4
        %v1159 = vor.u32 %v1158, %v1154
        %v1160 = vrot.slane %v1159, 4
        %v1162 = vshll.u32 %v1089, 16
        %v1164 = vrot.slane %v1162, 5
        %v1165 = vsel %vm1093, %v1160, %v1164
        %v1167 = vshrl.u32 %v1083, 16
        %v1169 = vrot.slane %v1167, 4
        %v1170 = vshll.u32 %v1083, 16
        %v1172 = vrot.slane %v1170, 5
        %v1173 = vor.u32 %v1169, %v1172
        %v1174 = vrot.slane %v1173, 4
        %v1176 = vshll.u32 %v1084, 16
        %v1178 = vrot.slane %v1176, 5
        %v1179 = vsel %vm1093, %v1174, %v1178
        %v1180 = vshrl.u32 %v1084, 16
        %v1182 = vrot.slane %v1180, 4
        %v1183 = vor.u32 %v1182, %v1178
        %v1184 = vrot.slane %v1183, 4
        %v1186 = vshll.u32 %v1090, 16
        %v1188 = vrot.slane %v1186, 5
        %v1189 = vsel %vm1093, %v1184, %v1188
        %s1190 = scalar_lea.vmem %s4, 8
        %v1191 = vld [vmem:[%s1190] sm:$0xf]
        %v1192 = vld [vmem:[%s1190 + $0x4] sm:$0xf]
        %v1193 = vunpack.c.l.b16 %v1107
        %v1194 = vunpack.c.l.b16 %v1117
        %v1195 = vunpack.c.l.b16 %v1131
        %v1196 = vunpack.c.l.b16 %v1141
        %v1197 = vunpack.c.l.b16 %v1155
        %v1198 = vunpack.c.l.b16 %v1165
        %v1199 = vunpack.c.l.b16 %v1179
        %v1200 = vunpack.c.l.b16 %v1189
        %v1201 = vpack.c.b16 %v1194, %v1193
        %v1202 = vpack.c.b16 %v1196, %v1195
        %v1203 = vpack.c.b16 %v1198, %v1197
        %v1204 = vpack.c.b16 %v1200, %v1199
        %v1207 = vunpack.c.l.b16 %v1191
        %v1208 = vunpack.c.l.b16 %v1192
        %v1209 = vpack.c.b16 %v1208, %v1207
        %vm1211 = vcmask 130048
        %v1213 = vsel %vm1211, %v1201, 0
        %v1216 = vsel %vm1211, %v1202, 0
        %v1219 = vsel %vm1211, %v1203, 0
        %v1222 = vsel %vm1211, %v1204, 0
        %1224 = vmatprep.subr.bf16.mxu0 0
        %1225 = vmatpush1.bf16.msra.mxu0 %v1209
        %1226 = vmatprep.subr.bf16.mxu0 0
        %1227 = vmatpush1.bf16.msra.mxu0 0
        %1228 = vmatprep.subr.bf16.mxu0 0
        %1229 = vmatpush1.bf16.msra.mxu0 0
        %1230 = vmatprep.subr.bf16.mxu0 0
        %1231 = vmatpush1.bf16.msra.mxu0 0
        %1232 = vmatprep.subr.bf16.mxu0 0
        %1233 = vmatpush1.bf16.msra.mxu0 0
        %1234 = vmatprep.subr.bf16.mxu0 0
        %1235 = vmatpush1.bf16.msra.mxu0 0
        %1236 = vmatprep.subr.bf16.mxu0 0
        %1237 = vmatpush1.bf16.msra.mxu0 0
        %1238 = vmatprep.subr.bf16.mxu0 0
        %1239 = vmatpush1.bf16.msra.mxu0 0
        %1240 = vmatprep.subr.bf16.mxu0 0
        %1241 = vmatpush1.bf16.msra.mxu0 0
        %1242 = vmatprep.subr.bf16.mxu0 0
        %1243 = vmatpush1.bf16.msra.mxu0 0
        %1244 = vmatprep.subr.bf16.mxu0 0
        %1245 = vmatpush1.bf16.msra.mxu0 0
        %1246 = vmatprep.subr.bf16.mxu0 0
        %1247 = vmatpush1.bf16.msra.mxu0 0
        %1248 = vmatprep.subr.bf16.mxu0 0
        %1249 = vmatpush1.bf16.msra.mxu0 0
        %1250 = vmatprep.subr.bf16.mxu0 0
        %1251 = vmatpush1.bf16.msra.mxu0 0
        %1252 = vmatprep.subr.bf16.mxu0 0
        %1253 = vmatpush1.bf16.msra.mxu0 0
        %1254 = vmatprep.subr.bf16.mxu0 0
        %1255 = vmatpush1.bf16.msra.mxu0 0
        %1256 = vmatprep.mubr.bf16.mxu0 0
        %1257 = vmatmul.mubr.bf16.gmra.mrb[0].mxu0 %v1213
        %v1258 = vpop.f32.mrb[0].mxu0
        %v1259 = vadd.f32 0.0, %v1258
        %v1260 = vpop.f32.mrb[0].mxu0
        %v1261 = vpop.f32.mrb[0].mxu0
        %v1262 = vadd.f32 0.0, %v1261
        %v1263 = vpop.f32.mrb[0].mxu0
        %1264 = vmatprep.mubr.bf16.mxu0 0
        %1265 = vmatmul.mubr.bf16.gmra.mrb[0].mxu0 %v1216
        %v1266 = vpop.f32.mrb[0].mxu0
        %v1267 = vadd.f32 0.0, %v1266
        %v1268 = vpop.f32.mrb[0].mxu0
        %v1269 = vpop.f32.mrb[0].mxu0
        %v1270 = vadd.f32 0.0, %v1269
        %v1271 = vpop.f32.mrb[0].mxu0
        %1272 = vmatprep.mubr.bf16.mxu0 0
        %1273 = vmatmul.mubr.bf16.gmra.mrb[0].mxu0 %v1219
        %v1274 = vpop.f32.mrb[0].mxu0
        %v1275 = vadd.f32 0.0, %v1274
        %v1276 = vpop.f32.mrb[0].mxu0
        %v1277 = vpop.f32.mrb[0].mxu0
        %v1278 = vadd.f32 0.0, %v1277
        %v1279 = vpop.f32.mrb[0].mxu0
        %1280 = vmatprep.mubr.bf16.mxu0 0
        %1281 = vmatmul.mubr.bf16.gmra.mrb[0].mxu0 %v1222
        %v1282 = vpop.f32.mrb[0].mxu0
        %v1283 = vadd.f32 0.0, %v1282
        %v1284 = vpop.f32.mrb[0].mxu0
        %v1285 = vpop.f32.mrb[0].mxu0
        %v1286 = vadd.f32 0.0, %v1285
        %v1287 = vpop.f32.mrb[0].mxu0
        %1288 = vdwg.mxu0
        %v1297 = vunpack.c.l.b16 %v1077
        %v1298 = vunpack.c.l.b16 %v1078
        %v1299 = vunpack.c.l.b16 %v1079
        %v1300 = vunpack.c.l.b16 %v1080
        %v1301 = vunpack.c.l.b16 %v1081
        %v1302 = vunpack.c.l.b16 %v1082
        %v1303 = vunpack.c.l.b16 %v1083
        %v1304 = vunpack.c.l.b16 %v1084
        %v1305 = vpack.c.b16 %v1298, %v1297
        %v1306 = vpack.c.b16 %v1300, %v1299
        %v1307 = vpack.c.b16 %v1302, %v1301
        %v1308 = vpack.c.b16 %v1304, %v1303
        %v1311 = vunpack.c.l.b16 %v1085
        %v1312 = vunpack.c.l.b16 %v1086
        %v1313 = vpack.c.b16 %v1312, %v1311
        %v1316 = vsel %vm1211, %v1305, 0
        %v1319 = vsel %vm1211, %v1306, 0
        %v1322 = vsel %vm1211, %v1307, 0
        %v1325 = vsel %vm1211, %v1308, 0
        %1327 = vmatprep.subr.bf16.mxu0 0
        %1328 = vmatpush1.bf16.msra.mxu0 %v1313
        %1329 = vmatprep.subr.bf16.mxu0 0
        %1330 = vmatpush1.bf16.msra.mxu0 0
        %1331 = vmatprep.subr.bf16.mxu0 0
        %1332 = vmatpush1.bf16.msra.mxu0 0
        %1333 = vmatprep.subr.bf16.mxu0 0
        %1334 = vmatpush1.bf16.msra.mxu0 0
        %1335 = vmatprep.subr.bf16.mxu0 0
        %1336 = vmatpush1.bf16.msra.mxu0 0
        %1337 = vmatprep.subr.bf16.mxu0 0
        %1338 = vmatpush1.bf16.msra.mxu0 0
        %1339 = vmatprep.subr.bf16.mxu0 0
        %1340 = vmatpush1.bf16.msra.mxu0 0
        %1341 = vmatprep.subr.bf16.mxu0 0
        %1342 = vmatpush1.bf16.msra.mxu0 0
        %1343 = vmatprep.subr.bf16.mxu0 0
        %1344 = vmatpush1.bf16.msra.mxu0 0
        %1345 = vmatprep.subr.bf16.mxu0 0
        %1346 = vmatpush1.bf16.msra.mxu0 0
        %1347 = vmatprep.subr.bf16.mxu0 0
        %1348 = vmatpush1.bf16.msra.mxu0 0
        %1349 = vmatprep.subr.bf16.mxu0 0
        %1350 = vmatpush1.bf16.msra.mxu0 0
        %1351 = vmatprep.subr.bf16.mxu0 0
        %1352 = vmatpush1.bf16.msra.mxu0 0
        %1353 = vmatprep.subr.bf16.mxu0 0
        %1354 = vmatpush1.bf16.msra.mxu0 0
        %1355 = vmatprep.subr.bf16.mxu0 0
        %1356 = vmatpush1.bf16.msra.mxu0 0
        %1357 = vmatprep.subr.bf16.mxu0 0
        %1358 = vmatpush1.bf16.msra.mxu0 0
        %1359 = vmatprep.mubr.bf16.mxu0 0
        %1360 = vmatmul.mubr.bf16.gmra.mrb[0].mxu0 %v1316
        %v1361 = vpop.f32.mrb[0].mxu0
        %v1362 = vadd.f32 %v1259, %v1361
        %v1363 = vpop.f32.mrb[0].mxu0
        %v1364 = vpop.f32.mrb[0].mxu0
        %v1365 = vadd.f32 %v1262, %v1364
        %v1366 = vpop.f32.mrb[0].mxu0
        %1367 = vmatprep.mubr.bf16.mxu0 0
        %1368 = vmatmul.mubr.bf16.gmra.mrb[0].mxu0 %v1319
        %v1369 = vpop.f32.mrb[0].mxu0
        %v1370 = vadd.f32 %v1267, %v1369
        %v1371 = vpop.f32.mrb[0].mxu0
        %v1372 = vpop.f32.mrb[0].mxu0
        %v1373 = vadd.f32 %v1270, %v1372
        %v1374 = vpop.f32.mrb[0].mxu0
        %1375 = vmatprep.mubr.bf16.mxu0 0
        %1376 = vmatmul.mubr.bf16.gmra.mrb[0].mxu0 %v1322
        %v1377 = vpop.f32.mrb[0].mxu0
        %v1378 = vadd.f32 %v1275, %v1377
        %v1379 = vpop.f32.mrb[0].mxu0
        %v1380 = vpop.f32.mrb[0].mxu0
        %v1381 = vadd.f32 %v1278, %v1380
        %v1382 = vpop.f32.mrb[0].mxu0
        %1383 = vmatprep.mubr.bf16.mxu0 0
        %1384 = vmatmul.mubr.bf16.gmra.mrb[0].mxu0 %v1325
        %v1385 = vpop.f32.mrb[0].mxu0
        %v1386 = vadd.f32 %v1283, %v1385
        %v1387 = vpop.f32.mrb[0].mxu0
        %v1388 = vpop.f32.mrb[0].mxu0
        %v1389 = vadd.f32 %v1286, %v1388
        %v1390 = vpop.f32.mrb[0].mxu0
        %1391 = vdwg.mxu0
        %v1392 = vld [vmem:[#allocation2] sm:$0xe]
        %v1393 = vld [vmem:[#allocation2 + $0xc] sm:$0xe]
        %v1394 = vld [vmem:[#allocation2 + $0x18] sm:$0xe]
        %v1395 = vld [vmem:[#allocation2 + $0x24] sm:$0xe]
        %vm1404 = vcmask 1042432
        %vm1405 = vcmask 1046532
        %vm1406 = vmor %vm1404, %vm1405
        %v1407 = vrot.slane %v1392, 5
        %v1408 = vrot.slane %v1407, 4
        %v1409 = vrot.slane %v1078, 5
        %v1410 = vsel %vm1406, %v1408, %v1409
        %v1411 = vrot.slane %v1409, 4
        %v1412 = vrot.slane %v1087, 5
        %v1413 = vsel %vm1406, %v1411, %v1412
        %v1414 = vrot.slane %v1393, 5
        %v1415 = vrot.slane %v1414, 4
        %v1416 = vrot.slane %v1080, 5
        %v1417 = vsel %vm1406, %v1415, %v1416
        %v1418 = vrot.slane %v1416, 4
        %v1419 = vrot.slane %v1088, 5
        %v1420 = vsel %vm1406, %v1418, %v1419
        %v1421 = vrot.slane %v1394, 5
        %v1422 = vrot.slane %v1421, 4
        %v1423 = vrot.slane %v1082, 5
        %v1424 = vsel %vm1406, %v1422, %v1423
        %v1425 = vrot.slane %v1423, 4
        %v1426 = vrot.slane %v1089, 5
        %v1427 = vsel %vm1406, %v1425, %v1426
        %v1428 = vrot.slane %v1395, 5
        %v1429 = vrot.slane %v1428, 4
        %v1430 = vrot.slane %v1084, 5
        %v1431 = vsel %vm1406, %v1429, %v1430
        %v1432 = vrot.slane %v1430, 4
        %v1433 = vrot.slane %v1090, 5
        %v1434 = vsel %vm1406, %v1432, %v1433
        %s1435 = scalar_lea.vmem %s4, 16
        %v1436 = vld [vmem:[%s1435] sm:$0xf]
        %v1437 = vld [vmem:[%s1435 + $0x4] sm:$0xf]
        %v1438 = vunpack.c.l.b16 %v1410
        %v1439 = vunpack.c.l.b16 %v1413
        %v1440 = vunpack.c.l.b16 %v1417
        %v1441 = vunpack.c.l.b16 %v1420
        %v1442 = vunpack.c.l.b16 %v1424
        %v1443 = vunpack.c.l.b16 %v1427
        %v1444 = vunpack.c.l.b16 %v1431
        %v1445 = vunpack.c.l.b16 %v1434
        %v1446 = vpack.c.b16 %v1439, %v1438
        %v1447 = vpack.c.b16 %v1441, %v1440
        %v1448 = vpack.c.b16 %v1443, %v1442
        %v1449 = vpack.c.b16 %v1445, %v1444
        %v1452 = vunpack.c.l.b16 %v1436
        %v1453 = vunpack.c.l.b16 %v1437
        %v1454 = vpack.c.b16 %v1453, %v1452
        %v1457 = vsel %vm1211, %v1446, 0
        %v1460 = vsel %vm1211, %v1447, 0
        %v1463 = vsel %vm1211, %v1448, 0
        %v1466 = vsel %vm1211, %v1449, 0
        %1468 = vmatprep.subr.bf16.mxu0 0
        %1469 = vmatpush1.bf16.msra.mxu0 %v1454
        %1470 = vmatprep.subr.bf16.mxu0 0
        %1471 = vmatpush1.bf16.msra.mxu0 0
        %1472 = vmatprep.subr.bf16.mxu0 0
        %1473 = vmatpush1.bf16.msra.mxu0 0
        %1474 = vmatprep.subr.bf16.mxu0 0
        %1475 = vmatpush1.bf16.msra.mxu0 0
        %1476 = vmatprep.subr.bf16.mxu0 0
        %1477 = vmatpush1.bf16.msra.mxu0 0
        %1478 = vmatprep.subr.bf16.mxu0 0
        %1479 = vmatpush1.bf16.msra.mxu0 0
        %1480 = vmatprep.subr.bf16.mxu0 0
        %1481 = vmatpush1.bf16.msra.mxu0 0
        %1482 = vmatprep.subr.bf16.mxu0 0
        %1483 = vmatpush1.bf16.msra.mxu0 0
        %1484 = vmatprep.subr.bf16.mxu0 0
        %1485 = vmatpush1.bf16.msra.mxu0 0
        %1486 = vmatprep.subr.bf16.mxu0 0
        %1487 = vmatpush1.bf16.msra.mxu0 0
        %1488 = vmatprep.subr.bf16.mxu0 0
        %1489 = vmatpush1.bf16.msra.mxu0 0
        %1490 = vmatprep.subr.bf16.mxu0 0
        %1491 = vmatpush1.bf16.msra.mxu0 0
        %1492 = vmatprep.subr.bf16.mxu0 0
        %1493 = vmatpush1.bf16.msra.mxu0 0
        %1494 = vmatprep.subr.bf16.mxu0 0
        %1495 = vmatpush1.bf16.msra.mxu0 0
        %1496 = vmatprep.subr.bf16.mxu0 0
        %1497 = vmatpush1.bf16.msra.mxu0 0
        %1498 = vmatprep.subr.bf16.mxu0 0
        %1499 = vmatpush1.bf16.msra.mxu0 0
        %1500 = vmatprep.mubr.bf16.mxu0 0
        %1501 = vmatmul.mubr.bf16.gmra.mrb[0].mxu0 %v1457
        %v1502 = vpop.f32.mrb[0].mxu0
        %v1503 = vadd.f32 0.0, %v1502
        %v1504 = vpop.f32.mrb[0].mxu0
        %v1505 = vpop.f32.mrb[0].mxu0
        %v1506 = vadd.f32 0.0, %v1505
        %v1507 = vpop.f32.mrb[0].mxu0
        %1508 = vmatprep.mubr.bf16.mxu0 0
        %1509 = vmatmul.mubr.bf16.gmra.mrb[0].mxu0 %v1460
        %v1510 = vpop.f32.mrb[0].mxu0
        %v1511 = vadd.f32 0.0, %v1510
        %v1512 = vpop.f32.mrb[0].mxu0
        %v1513 = vpop.f32.mrb[0].mxu0
        %v1514 = vadd.f32 0.0, %v1513
        %v1515 = vpop.f32.mrb[0].mxu0
        %1516 = vmatprep.mubr.bf16.mxu0 0
        %1517 = vmatmul.mubr.bf16.gmra.mrb[0].mxu0 %v1463
        %v1518 = vpop.f32.mrb[0].mxu0
        %v1519 = vadd.f32 0.0, %v1518
        %v1520 = vpop.f32.mrb[0].mxu0
        %v1521 = vpop.f32.mrb[0].mxu0
        %v1522 = vadd.f32 0.0, %v1521
        %v1523 = vpop.f32.mrb[0].mxu0
        %1524 = vmatprep.mubr.bf16.mxu0 0
        %1525 = vmatmul.mubr.bf16.gmra.mrb[0].mxu0 %v1466
        %v1526 = vpop.f32.mrb[0].mxu0
        %v1527 = vadd.f32 0.0, %v1526
        %v1528 = vpop.f32.mrb[0].mxu0
        %v1529 = vpop.f32.mrb[0].mxu0
        %v1530 = vadd.f32 0.0, %v1529
        %v1531 = vpop.f32.mrb[0].mxu0
        %1532 = vdwg.mxu0
        %v1533 = vadd.f32 %v1362, %v1503
        %v1534 = vadd.f32 %v1365, %v1506
        %v1535 = vadd.f32 %v1370, %v1511
        %v1536 = vadd.f32 %v1373, %v1514
        %v1537 = vadd.f32 %v1378, %v1519
        %v1538 = vadd.f32 %v1381, %v1522
        %v1539 = vadd.f32 %v1386, %v1527
        %v1540 = vadd.f32 %v1389, %v1530
        %v1541 = vld [vmem:[%s790] sm:$0xf]
        %v1542 = vld [vmem:[%s790 + $0x4] sm:$0xf]
        %v1543 = vld [vmem:[%s790 + $0xc] sm:$0xf]
        %v1544 = vld [vmem:[%s790 + $0x10] sm:$0xf]
        %v1545 = vld [vmem:[%s790 + $0x18] sm:$0xf]
        %v1546 = vld [vmem:[%s790 + $0x1c] sm:$0xf]
        %v1547 = vld [vmem:[%s790 + $0x24] sm:$0xf]
        %v1548 = vld [vmem:[%s790 + $0x28] sm:$0xf]
        %s1549 = scalar_lea.vmem %s4, 24
        %v1550 = vld [vmem:[%s1549] sm:$0xf]
        %v1551 = vld [vmem:[%s1549 + $0x4] sm:$0xf]
        %v1560 = vunpack.c.l.b16 %v1541
        %v1561 = vunpack.c.l.b16 %v1542
        %v1562 = vunpack.c.l.b16 %v1543
        %v1563 = vunpack.c.l.b16 %v1544
        %v1564 = vunpack.c.l.b16 %v1545
        %v1565 = vunpack.c.l.b16 %v1546
        %v1566 = vunpack.c.l.b16 %v1547
        %v1567 = vunpack.c.l.b16 %v1548
        %v1568 = vpack.c.b16 %v1561, %v1560
        %v1569 = vpack.c.b16 %v1563, %v1562
        %v1570 = vpack.c.b16 %v1565, %v1564
        %v1571 = vpack.c.b16 %v1567, %v1566
        %v1574 = vunpack.c.l.b16 %v1550
        %v1575 = vunpack.c.l.b16 %v1551
        %v1576 = vpack.c.b16 %v1575, %v1574
        %v1579 = vsel %vm1211, %v1568, 0
        %v1582 = vsel %vm1211, %v1569, 0
        %v1585 = vsel %vm1211, %v1570, 0
        %v1588 = vsel %vm1211, %v1571, 0
        %1590 = vmatprep.subr.bf16.mxu0 0
        %1591 = vmatpush1.bf16.msra.mxu0 %v1576
        %1592 = vmatprep.subr.bf16.mxu0 0
        %1593 = vmatpush1.bf16.msra.mxu0 0
        %1594 = vmatprep.subr.bf16.mxu0 0
        %1595 = vmatpush1.bf16.msra.mxu0 0
        %1596 = vmatprep.subr.bf16.mxu0 0
        %1597 = vmatpush1.bf16.msra.mxu0 0
        %1598 = vmatprep.subr.bf16.mxu0 0
        %1599 = vmatpush1.bf16.msra.mxu0 0
        %1600 = vmatprep.subr.bf16.mxu0 0
        %1601 = vmatpush1.bf16.msra.mxu0 0
        %1602 = vmatprep.subr.bf16.mxu0 0
        %1603 = vmatpush1.bf16.msra.mxu0 0
        %1604 = vmatprep.subr.bf16.mxu0 0
        %1605 = vmatpush1.bf16.msra.mxu0 0
        %1606 = vmatprep.subr.bf16.mxu0 0
        %1607 = vmatpush1.bf16.msra.mxu0 0
        %1608 = vmatprep.subr.bf16.mxu0 0
        %1609 = vmatpush1.bf16.msra.mxu0 0
        %1610 = vmatprep.subr.bf16.mxu0 0
        %1611 = vmatpush1.bf16.msra.mxu0 0
        %1612 = vmatprep.subr.bf16.mxu0 0
        %1613 = vmatpush1.bf16.msra.mxu0 0
        %1614 = vmatprep.subr.bf16.mxu0 0
        %1615 = vmatpush1.bf16.msra.mxu0 0
        %1616 = vmatprep.subr.bf16.mxu0 0
        %1617 = vmatpush1.bf16.msra.mxu0 0
        %1618 = vmatprep.subr.bf16.mxu0 0
        %1619 = vmatpush1.bf16.msra.mxu0 0
        %1620 = vmatprep.subr.bf16.mxu0 0
        %1621 = vmatpush1.bf16.msra.mxu0 0
        %1622 = vmatprep.mubr.bf16.mxu0 0
        %1623 = vmatmul.mubr.bf16.gmra.mrb[0].mxu0 %v1579
        %v1624 = vpop.f32.mrb[0].mxu0
        %v1625 = vadd.f32 0.0, %v1624
        %v1626 = vpop.f32.mrb[0].mxu0
        %v1627 = vpop.f32.mrb[0].mxu0
        %v1628 = vadd.f32 0.0, %v1627
        %v1629 = vpop.f32.mrb[0].mxu0
        %1630 = vmatprep.mubr.bf16.mxu0 0
        %1631 = vmatmul.mubr.bf16.gmra.mrb[0].mxu0 %v1582
        %v1632 = vpop.f32.mrb[0].mxu0
        %v1633 = vadd.f32 0.0, %v1632
        %v1634 = vpop.f32.mrb[0].mxu0
        %v1635 = vpop.f32.mrb[0].mxu0
        %v1636 = vadd.f32 0.0, %v1635
        %v1637 = vpop.f32.mrb[0].mxu0
        %1638 = vmatprep.mubr.bf16.mxu0 0
        %1639 = vmatmul.mubr.bf16.gmra.mrb[0].mxu0 %v1585
        %v1640 = vpop.f32.mrb[0].mxu0
        %v1641 = vadd.f32 0.0, %v1640
        %v1642 = vpop.f32.mrb[0].mxu0
        %v1643 = vpop.f32.mrb[0].mxu0
        %v1644 = vadd.f32 0.0, %v1643
        %v1645 = vpop.f32.mrb[0].mxu0
        %1646 = vmatprep.mubr.bf16.mxu0 0
        %1647 = vmatmul.mubr.bf16.gmra.mrb[0].mxu0 %v1588
        %v1648 = vpop.f32.mrb[0].mxu0
        %v1649 = vadd.f32 0.0, %v1648
        %v1650 = vpop.f32.mrb[0].mxu0
        %v1651 = vpop.f32.mrb[0].mxu0
        %v1652 = vadd.f32 0.0, %v1651
        %v1653 = vpop.f32.mrb[0].mxu0
        %1654 = vdwg.mxu0
        %v1655 = vadd.f32 %v1533, %v1625
        %v1656 = vadd.f32 %v1534, %v1628
        %v1657 = vadd.f32 %v1535, %v1633
        %v1658 = vadd.f32 %v1536, %v1636
        %v1659 = vadd.f32 %v1537, %v1641
        %v1660 = vadd.f32 %v1538, %v1644
        %v1661 = vadd.f32 %v1539, %v1649
        %v1662 = vadd.f32 %v1540, %v1652
        %v1663 = vld [vmem:[%s790] sm:$0xf]
        %v1664 = vld [vmem:[%s790 + $0x4] sm:$0xf]
        %v1665 = vld [vmem:[%s790 + $0x8] sm:$0x1]
        %v1666 = vld [vmem:[%s790 + $0xc] sm:$0xf]
        %v1667 = vld [vmem:[%s790 + $0x10] sm:$0xf]
        %v1668 = vld [vmem:[%s790 + $0x14] sm:$0x1]
        %v1669 = vld [vmem:[%s790 + $0x18] sm:$0xf]
        %v1670 = vld [vmem:[%s790 + $0x1c] sm:$0xf]
        %v1671 = vld [vmem:[%s790 + $0x20] sm:$0x1]
        %v1672 = vld [vmem:[%s790 + $0x24] sm:$0xf]
        %v1673 = vld [vmem:[%s790 + $0x28] sm:$0xf]
        %v1674 = vld [vmem:[%s790 + $0x2c] sm:$0x1]
        %v1676 = vshrl.u32 %v1663, 16
        %v1678 = vrot.slane %v1676, 4
        %v1679 = vshll.u32 %v1663, 16
        %v1681 = vrot.slane %v1679, 5
        %v1682 = vor.u32 %v1678, %v1681
        %v1683 = vrot.slane %v1682, 4
        %v1685 = vshll.u32 %v1664, 16
        %v1687 = vrot.slane %v1685, 5
        %v1688 = vsel %vm1093, %v1683, %v1687
        %v1689 = vshrl.u32 %v1664, 16
        %v1691 = vrot.slane %v1689, 4
        %v1692 = vor.u32 %v1691, %v1687
        %v1693 = vrot.slane %v1692, 4
        %v1695 = vshll.u32 %v1665, 16
        %v1697 = vrot.slane %v1695, 5
        %v1698 = vsel %vm1093, %v1693, %v1697
        %v1700 = vshrl.u32 %v1666, 16
        %v1702 = vrot.slane %v1700, 4
        %v1703 = vshll.u32 %v1666, 16
        %v1705 = vrot.slane %v1703, 5
        %v1706 = vor.u32 %v1702, %v1705
        %v1707 = vrot.slane %v1706, 4
        %v1709 = vshll.u32 %v1667, 16
        %v1711 = vrot.slane %v1709, 5
        %v1712 = vsel %vm1093, %v1707, %v1711
        %v1713 = vshrl.u32 %v1667, 16
        %v1715 = vrot.slane %v1713, 4
        %v1716 = vor.u32 %v1715, %v1711
        %v1717 = vrot.slane %v1716, 4
        %v1719 = vshll.u32 %v1668, 16
        %v1721 = vrot.slane %v1719, 5
        %v1722 = vsel %vm1093, %v1717, %v1721
        %v1724 = vshrl.u32 %v1669, 16
        %v1726 = vrot.slane %v1724, 4
        %v1727 = vshll.u32 %v1669, 16
        %v1729 = vrot.slane %v1727, 5
        %v1730 = vor.u32 %v1726, %v1729
        %v1731 = vrot.slane %v1730, 4
        %v1733 = vshll.u32 %v1670, 16
        %v1735 = vrot.slane %v1733, 5
        %v1736 = vsel %vm1093, %v1731, %v1735
        %v1737 = vshrl.u32 %v1670, 16
        %v1739 = vrot.slane %v1737, 4
        %v1740 = vor.u32 %v1739, %v1735
        %v1741 = vrot.slane %v1740, 4
        %v1743 = vshll.u32 %v1671, 16
        %v1745 = vrot.slane %v1743, 5
        %v1746 = vsel %vm1093, %v1741, %v1745
        %v1748 = vshrl.u32 %v1672, 16
        %v1750 = vrot.slane %v1748, 4
        %v1751 = vshll.u32 %v1672, 16
        %v1753 = vrot.slane %v1751, 5
        %v1754 = vor.u32 %v1750, %v1753
        %v1755 = vrot.slane %v1754, 4
        %v1757 = vshll.u32 %v1673, 16
        %v1759 = vrot.slane %v1757, 5
        %v1760 = vsel %vm1093, %v1755, %v1759
        %v1761 = vshrl.u32 %v1673, 16
        %v1763 = vrot.slane %v1761, 4
        %v1764 = vor.u32 %v1763, %v1759
        %v1765 = vrot.slane %v1764, 4
        %v1767 = vshll.u32 %v1674, 16
        %v1769 = vrot.slane %v1767, 5
        %v1770 = vsel %vm1093, %v1765, %v1769
        %s1771 = scalar_lea.vmem %s4, 32
        %v1772 = vld [vmem:[%s1771] sm:$0xf]
        %v1773 = vld [vmem:[%s1771 + $0x4] sm:$0xf]
        %v1774 = vunpack.c.l.b16 %v1688
        %v1775 = vunpack.c.l.b16 %v1698
        %v1776 = vunpack.c.l.b16 %v1712
        %v1777 = vunpack.c.l.b16 %v1722
        %v1778 = vunpack.c.l.b16 %v1736
        %v1779 = vunpack.c.l.b16 %v1746
        %v1780 = vunpack.c.l.b16 %v1760
        %v1781 = vunpack.c.l.b16 %v1770
        %v1782 = vpack.c.b16 %v1775, %v1774
        %v1783 = vpack.c.b16 %v1777, %v1776
        %v1784 = vpack.c.b16 %v1779, %v1778
        %v1785 = vpack.c.b16 %v1781, %v1780
        %v1788 = vunpack.c.l.b16 %v1772
        %v1789 = vunpack.c.l.b16 %v1773
        %v1790 = vpack.c.b16 %v1789, %v1788
        %v1793 = vsel %vm1211, %v1782, 0
        %v1796 = vsel %vm1211, %v1783, 0
        %v1799 = vsel %vm1211, %v1784, 0
        %v1802 = vsel %vm1211, %v1785, 0
        %1804 = vmatprep.subr.bf16.mxu0 0
        %1805 = vmatpush1.bf16.msra.mxu0 %v1790
        %1806 = vmatprep.subr.bf16.mxu0 0
        %1807 = vmatpush1.bf16.msra.mxu0 0
        %1808 = vmatprep.subr.bf16.mxu0 0
        %1809 = vmatpush1.bf16.msra.mxu0 0
        %1810 = vmatprep.subr.bf16.mxu0 0
        %1811 = vmatpush1.bf16.msra.mxu0 0
        %1812 = vmatprep.subr.bf16.mxu0 0
        %1813 = vmatpush1.bf16.msra.mxu0 0
        %1814 = vmatprep.subr.bf16.mxu0 0
        %1815 = vmatpush1.bf16.msra.mxu0 0
        %1816 = vmatprep.subr.bf16.mxu0 0
        %1817 = vmatpush1.bf16.msra.mxu0 0
        %1818 = vmatprep.subr.bf16.mxu0 0
        %1819 = vmatpush1.bf16.msra.mxu0 0
        %1820 = vmatprep.subr.bf16.mxu0 0
        %1821 = vmatpush1.bf16.msra.mxu0 0
        %1822 = vmatprep.subr.bf16.mxu0 0
        %1823 = vmatpush1.bf16.msra.mxu0 0
        %1824 = vmatprep.subr.bf16.mxu0 0
        %1825 = vmatpush1.bf16.msra.mxu0 0
        %1826 = vmatprep.subr.bf16.mxu0 0
        %1827 = vmatpush1.bf16.msra.mxu0 0
        %1828 = vmatprep.subr.bf16.mxu0 0
        %1829 = vmatpush1.bf16.msra.mxu0 0
        %1830 = vmatprep.subr.bf16.mxu0 0
        %1831 = vmatpush1.bf16.msra.mxu0 0
        %1832 = vmatprep.subr.bf16.mxu0 0
        %1833 = vmatpush1.bf16.msra.mxu0 0
        %1834 = vmatprep.subr.bf16.mxu0 0
        %1835 = vmatpush1.bf16.msra.mxu0 0
        %1836 = vmatprep.mubr.bf16.mxu0 0
        %1837 = vmatmul.mubr.bf16.gmra.mrb[0].mxu0 %v1793
        %v1838 = vpop.f32.mrb[0].mxu0
        %v1839 = vadd.f32 0.0, %v1838
        %v1840 = vpop.f32.mrb[0].mxu0
        %v1841 = vpop.f32.mrb[0].mxu0
        %v1842 = vadd.f32 0.0, %v1841
        %v1843 = vpop.f32.mrb[0].mxu0
        %1844 = vmatprep.mubr.bf16.mxu0 0
        %1845 = vmatmul.mubr.bf16.gmra.mrb[0].mxu0 %v1796
        %v1846 = vpop.f32.mrb[0].mxu0
        %v1847 = vadd.f32 0.0, %v1846
        %v1848 = vpop.f32.mrb[0].mxu0
        %v1849 = vpop.f32.mrb[0].mxu0
        %v1850 = vadd.f32 0.0, %v1849
        %v1851 = vpop.f32.mrb[0].mxu0
        %1852 = vmatprep.mubr.bf16.mxu0 0
        %1853 = vmatmul.mubr.bf16.gmra.mrb[0].mxu0 %v1799
        %v1854 = vpop.f32.mrb[0].mxu0
        %v1855 = vadd.f32 0.0, %v1854
        %v1856 = vpop.f32.mrb[0].mxu0
        %v1857 = vpop.f32.mrb[0].mxu0
        %v1858 = vadd.f32 0.0, %v1857
        %v1859 = vpop.f32.mrb[0].mxu0
        %1860 = vmatprep.mubr.bf16.mxu0 0
        %1861 = vmatmul.mubr.bf16.gmra.mrb[0].mxu0 %v1802
        %v1862 = vpop.f32.mrb[0].mxu0
        %v1863 = vadd.f32 0.0, %v1862
        %v1864 = vpop.f32.mrb[0].mxu0
        %v1865 = vpop.f32.mrb[0].mxu0
        %v1866 = vadd.f32 0.0, %v1865
        %v1867 = vpop.f32.mrb[0].mxu0
        %1868 = vdwg.mxu0
        %v1869 = vadd.f32 %v1655, %v1839
        %v1870 = vadd.f32 %v1656, %v1842
        %v1871 = vadd.f32 %v1657, %v1847
        %v1872 = vadd.f32 %v1658, %v1850
        %v1873 = vadd.f32 %v1659, %v1855
        %v1874 = vadd.f32 %v1660, %v1858
        %v1875 = vadd.f32 %v1661, %v1863
        %v1876 = vadd.f32 %v1662, %v1866
        %v1877 = vld [vmem:[%s790] sm:$0xe]
        %v1878 = vld [vmem:[%s790 + $0xc] sm:$0xe]
        %v1879 = vld [vmem:[%s790 + $0x18] sm:$0xe]
        %v1880 = vld [vmem:[%s790 + $0x24] sm:$0xe]
        %v1893 = vrot.slane %v1877, 5
        %v1894 = vrot.slane %v1893, 4
        %v1895 = vrot.slane %v1664, 5
        %v1896 = vsel %vm1406, %v1894, %v1895
        %v1897 = vrot.slane %v1895, 4
        %v1898 = vrot.slane %v1665, 5
        %v1899 = vsel %vm1406, %v1897, %v1898
        %v1900 = vrot.slane %v1878, 5
        %v1901 = vrot.slane %v1900, 4
        %v1902 = vrot.slane %v1667, 5
        %v1903 = vsel %vm1406, %v1901, %v1902
        %v1904 = vrot.slane %v1902, 4
        %v1905 = vrot.slane %v1668, 5
        %v1906 = vsel %vm1406, %v1904, %v1905
        %v1907 = vrot.slane %v1879, 5
        %v1908 = vrot.slane %v1907, 4
        %v1909 = vrot.slane %v1670, 5
        %v1910 = vsel %vm1406, %v1908, %v1909
        %v1911 = vrot.slane %v1909, 4
        %v1912 = vrot.slane %v1671, 5
        %v1913 = vsel %vm1406, %v1911, %v1912
        %v1914 = vrot.slane %v1880, 5
        %v1915 = vrot.slane %v1914, 4
        %v1916 = vrot.slane %v1673, 5
        %v1917 = vsel %vm1406, %v1915, %v1916
        %v1918 = vrot.slane %v1916, 4
        %v1919 = vrot.slane %v1674, 5
        %v1920 = vsel %vm1406, %v1918, %v1919
        %s1921 = scalar_lea.vmem %s4, 40
        %v1922 = vld [vmem:[%s1921] sm:$0xf]
        %v1923 = vld [vmem:[%s1921 + $0x4] sm:$0xf]
        %v1924 = vunpack.c.l.b16 %v1896
        %v1925 = vunpack.c.l.b16 %v1899
        %v1926 = vunpack.c.l.b16 %v1903
        %v1927 = vunpack.c.l.b16 %v1906
        %v1928 = vunpack.c.l.b16 %v1910
        %v1929 = vunpack.c.l.b16 %v1913
        %v1930 = vunpack.c.l.b16 %v1917
        %v1931 = vunpack.c.l.b16 %v1920
        %v1932 = vpack.c.b16 %v1925, %v1924
        %v1933 = vpack.c.b16 %v1927, %v1926
        %v1934 = vpack.c.b16 %v1929, %v1928
        %v1935 = vpack.c.b16 %v1931, %v1930
        %v1938 = vunpack.c.l.b16 %v1922
        %v1939 = vunpack.c.l.b16 %v1923
        %v1940 = vpack.c.b16 %v1939, %v1938
        %v1943 = vsel %vm1211, %v1932, 0
        %v1946 = vsel %vm1211, %v1933, 0
        %v1949 = vsel %vm1211, %v1934, 0
        %v1952 = vsel %vm1211, %v1935, 0
        %1954 = vmatprep.subr.bf16.mxu0 0
        %1955 = vmatpush1.bf16.msra.mxu0 %v1940
        %1956 = vmatprep.subr.bf16.mxu0 0
        %1957 = vmatpush1.bf16.msra.mxu0 0
        %1958 = vmatprep.subr.bf16.mxu0 0
        %1959 = vmatpush1.bf16.msra.mxu0 0
        %1960 = vmatprep.subr.bf16.mxu0 0
        %1961 = vmatpush1.bf16.msra.mxu0 0
        %1962 = vmatprep.subr.bf16.mxu0 0
        %1963 = vmatpush1.bf16.msra.mxu0 0
        %1964 = vmatprep.subr.bf16.mxu0 0
        %1965 = vmatpush1.bf16.msra.mxu0 0
        %1966 = vmatprep.subr.bf16.mxu0 0
        %1967 = vmatpush1.bf16.msra.mxu0 0
        %1968 = vmatprep.subr.bf16.mxu0 0
        %1969 = vmatpush1.bf16.msra.mxu0 0
        %1970 = vmatprep.subr.bf16.mxu0 0
        %1971 = vmatpush1.bf16.msra.mxu0 0
        %1972 = vmatprep.subr.bf16.mxu0 0
        %1973 = vmatpush1.bf16.msra.mxu0 0
        %1974 = vmatprep.subr.bf16.mxu0 0
        %1975 = vmatpush1.bf16.msra.mxu0 0
        %1976 = vmatprep.subr.bf16.mxu0 0
        %1977 = vmatpush1.bf16.msra.mxu0 0
        %1978 = vmatprep.subr.bf16.mxu0 0
        %1979 = vmatpush1.bf16.msra.mxu0 0
        %1980 = vmatprep.subr.bf16.mxu0 0
        %1981 = vmatpush1.bf16.msra.mxu0 0
        %1982 = vmatprep.subr.bf16.mxu0 0
        %1983 = vmatpush1.bf16.msra.mxu0 0
        %1984 = vmatprep.subr.bf16.mxu0 0
        %1985 = vmatpush1.bf16.msra.mxu0 0
        %1986 = vmatprep.mubr.bf16.mxu0 0
        %1987 = vmatmul.mubr.bf16.gmra.mrb[0].mxu0 %v1943
        %v1988 = vpop.f32.mrb[0].mxu0
        %v1989 = vadd.f32 0.0, %v1988
        %v1990 = vpop.f32.mrb[0].mxu0
        %v1991 = vpop.f32.mrb[0].mxu0
        %v1992 = vadd.f32 0.0, %v1991
        %v1993 = vpop.f32.mrb[0].mxu0
        %1994 = vmatprep.mubr.bf16.mxu0 0
        %1995 = vmatmul.mubr.bf16.gmra.mrb[0].mxu0 %v1946
        %v1996 = vpop.f32.mrb[0].mxu0
        %v1997 = vadd.f32 0.0, %v1996
        %v1998 = vpop.f32.mrb[0].mxu0
        %v1999 = vpop.f32.mrb[0].mxu0
        %v2000 = vadd.f32 0.0, %v1999
        %v2001 = vpop.f32.mrb[0].mxu0
        %2002 = vmatprep.mubr.bf16.mxu0 0
        %2003 = vmatmul.mubr.bf16.gmra.mrb[0].mxu0 %v1949
        %v2004 = vpop.f32.mrb[0].mxu0
        %v2005 = vadd.f32 0.0, %v2004
        %v2006 = vpop.f32.mrb[0].mxu0
        %v2007 = vpop.f32.mrb[0].mxu0
        %v2008 = vadd.f32 0.0, %v2007
        %v2009 = vpop.f32.mrb[0].mxu0
        %2010 = vmatprep.mubr.bf16.mxu0 0
        %2011 = vmatmul.mubr.bf16.gmra.mrb[0].mxu0 %v1952
        %v2012 = vpop.f32.mrb[0].mxu0
        %v2013 = vadd.f32 0.0, %v2012
        %v2014 = vpop.f32.mrb[0].mxu0
        %v2015 = vpop.f32.mrb[0].mxu0
        %v2016 = vadd.f32 0.0, %v2015
        %v2017 = vpop.f32.mrb[0].mxu0
        %2018 = vdwg.mxu0
        %v2019 = vadd.f32 %v1869, %v1989
        %v2020 = vadd.f32 %v1870, %v1992
        %v2021 = vadd.f32 %v1871, %v1997
        %v2022 = vadd.f32 %v1872, %v2000
        %v2023 = vadd.f32 %v1873, %v2005
        %v2024 = vadd.f32 %v1874, %v2008
        %v2025 = vadd.f32 %v1875, %v2013
        %v2026 = vadd.f32 %v1876, %v2016
        %s2027 = scalar_lea.vmem [#allocation2], 24
        %v2028 = vld [vmem:[%s2027] sm:$0xf]
        %v2029 = vld [vmem:[%s2027 + $0x4] sm:$0xf]
        %v2030 = vld [vmem:[%s2027 + $0xc] sm:$0xf]
        %v2031 = vld [vmem:[%s2027 + $0x10] sm:$0xf]
        %v2032 = vld [vmem:[%s2027 + $0x18] sm:$0xf]
        %v2033 = vld [vmem:[%s2027 + $0x1c] sm:$0xf]
        %v2034 = vld [vmem:[%s2027 + $0x24] sm:$0xf]
        %v2035 = vld [vmem:[%s2027 + $0x28] sm:$0xf]
        %s2036 = scalar_lea.vmem %s4, 48
        %v2037 = vld [vmem:[%s2036] sm:$0xf]
        %v2038 = vld [vmem:[%s2036 + $0x4] sm:$0xf]
        %v2047 = vunpack.c.l.b16 %v2028
        %v2048 = vunpack.c.l.b16 %v2029
        %v2049 = vunpack.c.l.b16 %v2030
        %v2050 = vunpack.c.l.b16 %v2031
        %v2051 = vunpack.c.l.b16 %v2032
        %v2052 = vunpack.c.l.b16 %v2033
        %v2053 = vunpack.c.l.b16 %v2034
        %v2054 = vunpack.c.l.b16 %v2035
        %v2055 = vpack.c.b16 %v2048, %v2047
        %v2056 = vpack.c.b16 %v2050, %v2049
        %v2057 = vpack.c.b16 %v2052, %v2051
        %v2058 = vpack.c.b16 %v2054, %v2053
        %v2061 = vunpack.c.l.b16 %v2037
        %v2062 = vunpack.c.l.b16 %v2038
        %v2063 = vpack.c.b16 %v2062, %v2061
        %v2066 = vsel %vm1211, %v2055, 0
        %v2069 = vsel %vm1211, %v2056, 0
        %v2072 = vsel %vm1211, %v2057, 0
        %v2075 = vsel %vm1211, %v2058, 0
        %2077 = vmatprep.subr.bf16.mxu0 0
        %2078 = vmatpush1.bf16.msra.mxu0 %v2063
        %2079 = vmatprep.subr.bf16.mxu0 0
        %2080 = vmatpush1.bf16.msra.mxu0 0
        %2081 = vmatprep.subr.bf16.mxu0 0
        %2082 = vmatpush1.bf16.msra.mxu0 0
        %2083 = vmatprep.subr.bf16.mxu0 0
        %2084 = vmatpush1.bf16.msra.mxu0 0
        %2085 = vmatprep.subr.bf16.mxu0 0
        %2086 = vmatpush1.bf16.msra.mxu0 0
        %2087 = vmatprep.subr.bf16.mxu0 0
        %2088 = vmatpush1.bf16.msra.mxu0 0
        %2089 = vmatprep.subr.bf16.mxu0 0
        %2090 = vmatpush1.bf16.msra.mxu0 0
        %2091 = vmatprep.subr.bf16.mxu0 0
        %2092 = vmatpush1.bf16.msra.mxu0 0
        %2093 = vmatprep.subr.bf16.mxu0 0
        %2094 = vmatpush1.bf16.msra.mxu0 0
        %2095 = vmatprep.subr.bf16.mxu0 0
        %2096 = vmatpush1.bf16.msra.mxu0 0
        %2097 = vmatprep.subr.bf16.mxu0 0
        %2098 = vmatpush1.bf16.msra.mxu0 0
        %2099 = vmatprep.subr.bf16.mxu0 0
        %2100 = vmatpush1.bf16.msra.mxu0 0
        %2101 = vmatprep.subr.bf16.mxu0 0
        %2102 = vmatpush1.bf16.msra.mxu0 0
        %2103 = vmatprep.subr.bf16.mxu0 0
        %2104 = vmatpush1.bf16.msra.mxu0 0
        %2105 = vmatprep.subr.bf16.mxu0 0
        %2106 = vmatpush1.bf16.msra.mxu0 0
        %2107 = vmatprep.subr.bf16.mxu0 0
        %2108 = vmatpush1.bf16.msra.mxu0 0
        %2109 = vmatprep.mubr.bf16.mxu0 0
        %2110 = vmatmul.mubr.bf16.gmra.mrb[0].mxu0 %v2066
        %v2111 = vpop.f32.mrb[0].mxu0
        %v2112 = vadd.f32 0.0, %v2111
        %v2113 = vpop.f32.mrb[0].mxu0
        %v2114 = vpop.f32.mrb[0].mxu0
        %v2115 = vadd.f32 0.0, %v2114
        %v2116 = vpop.f32.mrb[0].mxu0
        %2117 = vmatprep.mubr.bf16.mxu0 0
        %2118 = vmatmul.mubr.bf16.gmra.mrb[0].mxu0 %v2069
        %v2119 = vpop.f32.mrb[0].mxu0
        %v2120 = vadd.f32 0.0, %v2119
        %v2121 = vpop.f32.mrb[0].mxu0
        %v2122 = vpop.f32.mrb[0].mxu0
        %v2123 = vadd.f32 0.0, %v2122
        %v2124 = vpop.f32.mrb[0].mxu0
        %2125 = vmatprep.mubr.bf16.mxu0 0
        %2126 = vmatmul.mubr.bf16.gmra.mrb[0].mxu0 %v2072
        %v2127 = vpop.f32.mrb[0].mxu0
        %v2128 = vadd.f32 0.0, %v2127
        %v2129 = vpop.f32.mrb[0].mxu0
        %v2130 = vpop.f32.mrb[0].mxu0
        %v2131 = vadd.f32 0.0, %v2130
        %v2132 = vpop.f32.mrb[0].mxu0
        %2133 = vmatprep.mubr.bf16.mxu0 0
        %2134 = vmatmul.mubr.bf16.gmra.mrb[0].mxu0 %v2075
        %v2135 = vpop.f32.mrb[0].mxu0
        %v2136 = vadd.f32 0.0, %v2135
        %v2137 = vpop.f32.mrb[0].mxu0
        %v2138 = vpop.f32.mrb[0].mxu0
        %v2139 = vadd.f32 0.0, %v2138
        %v2140 = vpop.f32.mrb[0].mxu0
        %2141 = vdwg.mxu0
        %v2142 = vadd.f32 %v2019, %v2112
        %v2143 = vadd.f32 %v2020, %v2115
        %v2144 = vadd.f32 %v2021, %v2120
        %v2145 = vadd.f32 %v2022, %v2123
        %v2146 = vadd.f32 %v2023, %v2128
        %v2147 = vadd.f32 %v2024, %v2131
        %v2148 = vadd.f32 %v2025, %v2136
        %v2149 = vadd.f32 %v2026, %v2139
        %v2150 = vld [vmem:[%s2027] sm:$0xf]
        %v2151 = vld [vmem:[%s2027 + $0x4] sm:$0xf]
        %v2152 = vld [vmem:[%s2027 + $0x8] sm:$0x1]
        %v2153 = vld [vmem:[%s2027 + $0xc] sm:$0xf]
        %v2154 = vld [vmem:[%s2027 + $0x10] sm:$0xf]
        %v2155 = vld [vmem:[%s2027 + $0x14] sm:$0x1]
        %v2156 = vld [vmem:[%s2027 + $0x18] sm:$0xf]
        %v2157 = vld [vmem:[%s2027 + $0x1c] sm:$0xf]
        %v2158 = vld [vmem:[%s2027 + $0x20] sm:$0x1]
        %v2159 = vld [vmem:[%s2027 + $0x24] sm:$0xf]
        %v2160 = vld [vmem:[%s2027 + $0x28] sm:$0xf]
        %v2161 = vld [vmem:[%s2027 + $0x2c] sm:$0x1]
        %v2163 = vshrl.u32 %v2150, 16
        %v2165 = vrot.slane %v2163, 4
        %v2166 = vshll.u32 %v2150, 16
        %v2168 = vrot.slane %v2166, 5
        %v2169 = vor.u32 %v2165, %v2168
        %v2170 = vrot.slane %v2169, 4
        %v2172 = vshll.u32 %v2151, 16
        %v2174 = vrot.slane %v2172, 5
        %v2175 = vsel %vm1093, %v2170, %v2174
        %v2176 = vshrl.u32 %v2151, 16
        %v2178 = vrot.slane %v2176, 4
        %v2179 = vor.u32 %v2178, %v2174
        %v2180 = vrot.slane %v2179, 4
        %v2182 = vshll.u32 %v2152, 16
        %v2184 = vrot.slane %v2182, 5
        %v2185 = vsel %vm1093, %v2180, %v2184
        %v2187 = vshrl.u32 %v2153, 16
        %v2189 = vrot.slane %v2187, 4
        %v2190 = vshll.u32 %v2153, 16
        %v2192 = vrot.slane %v2190, 5
        %v2193 = vor.u32 %v2189, %v2192
        %v2194 = vrot.slane %v2193, 4
        %v2196 = vshll.u32 %v2154, 16
        %v2198 = vrot.slane %v2196, 5
        %v2199 = vsel %vm1093, %v2194, %v2198
        %v2200 = vshrl.u32 %v2154, 16
        %v2202 = vrot.slane %v2200, 4
        %v2203 = vor.u32 %v2202, %v2198
        %v2204 = vrot.slane %v2203, 4
        %v2206 = vshll.u32 %v2155, 16
        %v2208 = vrot.slane %v2206, 5
        %v2209 = vsel %vm1093, %v2204, %v2208
        %v2211 = vshrl.u32 %v2156, 16
        %v2213 = vrot.slane %v2211, 4
        %v2214 = vshll.u32 %v2156, 16
        %v2216 = vrot.slane %v2214, 5
        %v2217 = vor.u32 %v2213, %v2216
        %v2218 = vrot.slane %v2217, 4
        %v2220 = vshll.u32 %v2157, 16
        %v2222 = vrot.slane %v2220, 5
        %v2223 = vsel %vm1093, %v2218, %v2222
        %v2224 = vshrl.u32 %v2157, 16
        %v2226 = vrot.slane %v2224, 4
        %v2227 = vor.u32 %v2226, %v2222
        %v2228 = vrot.slane %v2227, 4
        %v2230 = vshll.u32 %v2158, 16
        %v2232 = vrot.slane %v2230, 5
        %v2233 = vsel %vm1093, %v2228, %v2232
        %v2235 = vshrl.u32 %v2159, 16
        %v2237 = vrot.slane %v2235, 4
        %v2238 = vshll.u32 %v2159, 16
        %v2240 = vrot.slane %v2238, 5
        %v2241 = vor.u32 %v2237, %v2240
        %v2242 = vrot.slane %v2241, 4
        %v2244 = vshll.u32 %v2160, 16
        %v2246 = vrot.slane %v2244, 5
        %v2247 = vsel %vm1093, %v2242, %v2246
        %v2248 = vshrl.u32 %v2160, 16
        %v2250 = vrot.slane %v2248, 4
        %v2251 = vor.u32 %v2250, %v2246
        %v2252 = vrot.slane %v2251, 4
        %v2254 = vshll.u32 %v2161, 16
        %v2256 = vrot.slane %v2254, 5
        %v2257 = vsel %vm1093, %v2252, %v2256
        %s2258 = scalar_lea.vmem %s4, 56
        %v2259 = vld [vmem:[%s2258] sm:$0xf]
        %v2260 = vld [vmem:[%s2258 + $0x4] sm:$0xf]
        %v2261 = vunpack.c.l.b16 %v2175
        %v2262 = vunpack.c.l.b16 %v2185
        %v2263 = vunpack.c.l.b16 %v2199
        %v2264 = vunpack.c.l.b16 %v2209
        %v2265 = vunpack.c.l.b16 %v2223
        %v2266 = vunpack.c.l.b16 %v2233
        %v2267 = vunpack.c.l.b16 %v2247
        %v2268 = vunpack.c.l.b16 %v2257
        %v2269 = vpack.c.b16 %v2262, %v2261
        %v2270 = vpack.c.b16 %v2264, %v2263
        %v2271 = vpack.c.b16 %v2266, %v2265
        %v2272 = vpack.c.b16 %v2268, %v2267
        %v2275 = vunpack.c.l.b16 %v2259
        %v2276 = vunpack.c.l.b16 %v2260
        %v2277 = vpack.c.b16 %v2276, %v2275
        %v2280 = vsel %vm1211, %v2269, 0
        %v2283 = vsel %vm1211, %v2270, 0
        %v2286 = vsel %vm1211, %v2271, 0
        %v2289 = vsel %vm1211, %v2272, 0
        %2291 = vmatprep.subr.bf16.mxu0 0
        %2292 = vmatpush1.bf16.msra.mxu0 %v2277
        %2293 = vmatprep.subr.bf16.mxu0 0
        %2294 = vmatpush1.bf16.msra.mxu0 0
        %2295 = vmatprep.subr.bf16.mxu0 0
        %2296 = vmatpush1.bf16.msra.mxu0 0
        %2297 = vmatprep.subr.bf16.mxu0 0
        %2298 = vmatpush1.bf16.msra.mxu0 0
        %2299 = vmatprep.subr.bf16.mxu0 0
        %2300 = vmatpush1.bf16.msra.mxu0 0
        %2301 = vmatprep.subr.bf16.mxu0 0
        %2302 = vmatpush1.bf16.msra.mxu0 0
        %2303 = vmatprep.subr.bf16.mxu0 0
        %2304 = vmatpush1.bf16.msra.mxu0 0
        %2305 = vmatprep.subr.bf16.mxu0 0
        %2306 = vmatpush1.bf16.msra.mxu0 0
        %2307 = vmatprep.subr.bf16.mxu0 0
        %2308 = vmatpush1.bf16.msra.mxu0 0
        %2309 = vmatprep.subr.bf16.mxu0 0
        %2310 = vmatpush1.bf16.msra.mxu0 0
        %2311 = vmatprep.subr.bf16.mxu0 0
        %2312 = vmatpush1.bf16.msra.mxu0 0
        %2313 = vmatprep.subr.bf16.mxu0 0
        %2314 = vmatpush1.bf16.msra.mxu0 0
        %2315 = vmatprep.subr.bf16.mxu0 0
        %2316 = vmatpush1.bf16.msra.mxu0 0
        %2317 = vmatprep.subr.bf16.mxu0 0
        %2318 = vmatpush1.bf16.msra.mxu0 0
        %2319 = vmatprep.subr.bf16.mxu0 0
        %2320 = vmatpush1.bf16.msra.mxu0 0
        %2321 = vmatprep.subr.bf16.mxu0 0
        %2322 = vmatpush1.bf16.msra.mxu0 0
        %2323 = vmatprep.mubr.bf16.mxu0 0
        %2324 = vmatmul.mubr.bf16.gmra.mrb[0].mxu0 %v2280
        %v2325 = vpop.f32.mrb[0].mxu0
        %v2326 = vadd.f32 0.0, %v2325
        %v2327 = vpop.f32.mrb[0].mxu0
        %v2328 = vpop.f32.mrb[0].mxu0
        %v2329 = vadd.f32 0.0, %v2328
        %v2330 = vpop.f32.mrb[0].mxu0
        %2331 = vmatprep.mubr.bf16.mxu0 0
        %2332 = vmatmul.mubr.bf16.gmra.mrb[0].mxu0 %v2283
        %v2333 = vpop.f32.mrb[0].mxu0
        %v2334 = vadd.f32 0.0, %v2333
        %v2335 = vpop.f32.mrb[0].mxu0
        %v2336 = vpop.f32.mrb[0].mxu0
        %v2337 = vadd.f32 0.0, %v2336
        %v2338 = vpop.f32.mrb[0].mxu0
        %2339 = vmatprep.mubr.bf16.mxu0 0
        %2340 = vmatmul.mubr.bf16.gmra.mrb[0].mxu0 %v2286
        %v2341 = vpop.f32.mrb[0].mxu0
        %v2342 = vadd.f32 0.0, %v2341
        %v2343 = vpop.f32.mrb[0].mxu0
        %v2344 = vpop.f32.mrb[0].mxu0
        %v2345 = vadd.f32 0.0, %v2344
        %v2346 = vpop.f32.mrb[0].mxu0
        %2347 = vmatprep.mubr.bf16.mxu0 0
        %2348 = vmatmul.mubr.bf16.gmra.mrb[0].mxu0 %v2289
        %v2349 = vpop.f32.mrb[0].mxu0
        %v2350 = vadd.f32 0.0, %v2349
        %v2351 = vpop.f32.mrb[0].mxu0
        %v2352 = vpop.f32.mrb[0].mxu0
        %v2353 = vadd.f32 0.0, %v2352
        %v2354 = vpop.f32.mrb[0].mxu0
        %2355 = vdwg.mxu0
        %v2356 = vadd.f32 %v2142, %v2326
        %v2357 = vadd.f32 %v2143, %v2329
        %v2358 = vadd.f32 %v2144, %v2334
        %v2359 = vadd.f32 %v2145, %v2337
        %v2360 = vadd.f32 %v2146, %v2342
        %v2361 = vadd.f32 %v2147, %v2345
        %v2362 = vadd.f32 %v2148, %v2350
        %v2363 = vadd.f32 %v2149, %v2353
        %v2364 = vld [vmem:[%s2027] sm:$0xe]
        %v2365 = vld [vmem:[%s2027 + $0xc] sm:$0xe]
        %v2366 = vld [vmem:[%s2027 + $0x18] sm:$0xe]
        %v2367 = vld [vmem:[%s2027 + $0x24] sm:$0xe]
        %v2380 = vrot.slane %v2364, 5
        %v2381 = vrot.slane %v2380, 4
        %v2382 = vrot.slane %v2151, 5
        %v2383 = vsel %vm1406, %v2381, %v2382
        %v2384 = vrot.slane %v2382, 4
        %v2385 = vrot.slane %v2152, 5
        %v2386 = vsel %vm1406, %v2384, %v2385
        %v2387 = vrot.slane %v2365, 5
        %v2388 = vrot.slane %v2387, 4
        %v2389 = vrot.slane %v2154, 5
        %v2390 = vsel %vm1406, %v2388, %v2389
        %v2391 = vrot.slane %v2389, 4
        %v2392 = vrot.slane %v2155, 5
        %v2393 = vsel %vm1406, %v2391, %v2392
        %v2394 = vrot.slane %v2366, 5
        %v2395 = vrot.slane %v2394, 4
        %v2396 = vrot.slane %v2157, 5
        %v2397 = vsel %vm1406, %v2395, %v2396
        %v2398 = vrot.slane %v2396, 4
        %v2399 = vrot.slane %v2158, 5
        %v2400 = vsel %vm1406, %v2398, %v2399
        %v2401 = vrot.slane %v2367, 5
        %v2402 = vrot.slane %v2401, 4
        %v2403 = vrot.slane %v2160, 5
        %v2404 = vsel %vm1406, %v2402, %v2403
        %v2405 = vrot.slane %v2403, 4
        %v2406 = vrot.slane %v2161, 5
        %v2407 = vsel %vm1406, %v2405, %v2406
        %s2408 = scalar_lea.vmem %s4, 64
        %v2409 = vld [vmem:[%s2408] sm:$0xf]
        %v2410 = vld [vmem:[%s2408 + $0x4] sm:$0xf]
        %v2411 = vunpack.c.l.b16 %v2383
        %v2412 = vunpack.c.l.b16 %v2386
        %v2413 = vunpack.c.l.b16 %v2390
        %v2414 = vunpack.c.l.b16 %v2393
        %v2415 = vunpack.c.l.b16 %v2397
        %v2416 = vunpack.c.l.b16 %v2400
        %v2417 = vunpack.c.l.b16 %v2404
        %v2418 = vunpack.c.l.b16 %v2407
        %v2419 = vpack.c.b16 %v2412, %v2411
        %v2420 = vpack.c.b16 %v2414, %v2413
        %v2421 = vpack.c.b16 %v2416, %v2415
        %v2422 = vpack.c.b16 %v2418, %v2417
        %v2425 = vunpack.c.l.b16 %v2409
        %v2426 = vunpack.c.l.b16 %v2410
        %v2427 = vpack.c.b16 %v2426, %v2425
        %v2430 = vsel %vm1211, %v2419, 0
        %v2433 = vsel %vm1211, %v2420, 0
        %v2436 = vsel %vm1211, %v2421, 0
        %v2439 = vsel %vm1211, %v2422, 0
        %2441 = vmatprep.subr.bf16.mxu0 0
        %2442 = vmatpush1.bf16.msra.mxu0 %v2427
        %2443 = vmatprep.subr.bf16.mxu0 0
        %2444 = vmatpush1.bf16.msra.mxu0 0
        %2445 = vmatprep.subr.bf16.mxu0 0
        %2446 = vmatpush1.bf16.msra.mxu0 0
        %2447 = vmatprep.subr.bf16.mxu0 0
        %2448 = vmatpush1.bf16.msra.mxu0 0
        %2449 = vmatprep.subr.bf16.mxu0 0
        %2450 = vmatpush1.bf16.msra.mxu0 0
        %2451 = vmatprep.subr.bf16.mxu0 0
        %2452 = vmatpush1.bf16.msra.mxu0 0
        %2453 = vmatprep.subr.bf16.mxu0 0
        %2454 = vmatpush1.bf16.msra.mxu0 0
        %2455 = vmatprep.subr.bf16.mxu0 0
        %2456 = vmatpush1.bf16.msra.mxu0 0
        %2457 = vmatprep.subr.bf16.mxu0 0
        %2458 = vmatpush1.bf16.msra.mxu0 0
        %2459 = vmatprep.subr.bf16.mxu0 0
        %2460 = vmatpush1.bf16.msra.mxu0 0
        %2461 = vmatprep.subr.bf16.mxu0 0
        %2462 = vmatpush1.bf16.msra.mxu0 0
        %2463 = vmatprep.subr.bf16.mxu0 0
        %2464 = vmatpush1.bf16.msra.mxu0 0
        %2465 = vmatprep.subr.bf16.mxu0 0
        %2466 = vmatpush1.bf16.msra.mxu0 0
        %2467 = vmatprep.subr.bf16.mxu0 0
        %2468 = vmatpush1.bf16.msra.mxu0 0
        %2469 = vmatprep.subr.bf16.mxu0 0
        %2470 = vmatpush1.bf16.msra.mxu0 0
        %2471 = vmatprep.subr.bf16.mxu0 0
        %2472 = vmatpush1.bf16.msra.mxu0 0
        %2473 = vmatprep.mubr.bf16.mxu0 0
        %2474 = vmatmul.mubr.bf16.gmra.mrb[0].mxu0 %v2430
        %v2475 = vpop.f32.mrb[0].mxu0
        %v2476 = vadd.f32 0.0, %v2475
        %v2477 = vpop.f32.mrb[0].mxu0
        %v2478 = vpop.f32.mrb[0].mxu0
        %v2479 = vadd.f32 0.0, %v2478
        %v2480 = vpop.f32.mrb[0].mxu0
        %2481 = vmatprep.mubr.bf16.mxu0 0
        %2482 = vmatmul.mubr.bf16.gmra.mrb[0].mxu0 %v2433
        %v2483 = vpop.f32.mrb[0].mxu0
        %v2484 = vadd.f32 0.0, %v2483
        %v2485 = vpop.f32.mrb[0].mxu0
        %v2486 = vpop.f32.mrb[0].mxu0
        %v2487 = vadd.f32 0.0, %v2486
        %v2488 = vpop.f32.mrb[0].mxu0
        %2489 = vmatprep.mubr.bf16.mxu0 0
        %2490 = vmatmul.mubr.bf16.gmra.mrb[0].mxu0 %v2436
        %v2491 = vpop.f32.mrb[0].mxu0
        %v2492 = vadd.f32 0.0, %v2491
        %v2493 = vpop.f32.mrb[0].mxu0
        %v2494 = vpop.f32.mrb[0].mxu0
        %v2495 = vadd.f32 0.0, %v2494
        %v2496 = vpop.f32.mrb[0].mxu0
        %2497 = vmatprep.mubr.bf16.mxu0 0
        %2498 = vmatmul.mubr.bf16.gmra.mrb[0].mxu0 %v2439
        %v2499 = vpop.f32.mrb[0].mxu0
        %v2500 = vadd.f32 0.0, %v2499
        %v2501 = vpop.f32.mrb[0].mxu0
        %v2502 = vpop.f32.mrb[0].mxu0
        %v2503 = vadd.f32 0.0, %v2502
        %v2504 = vpop.f32.mrb[0].mxu0
        %2505 = vdwg.mxu0
        %v2506 = vadd.f32 %v2356, %v2476
        %v2507 = vadd.f32 %v2357, %v2479
        %v2508 = vadd.f32 %v2358, %v2484
        %v2509 = vadd.f32 %v2359, %v2487
        %v2510 = vadd.f32 %v2360, %v2492
        %v2511 = vadd.f32 %v2361, %v2495
        %v2512 = vadd.f32 %v2362, %v2500
        %v2513 = vadd.f32 %v2363, %v2503
        %v2514 = vld [vmem:[%s7] sm:$0x1]
        %v2516 = vlaneseq
        %v2517 = vshrl.u32 %v2516, 7
        %v2518 = vsub.s32 0, %v2517
        %v2519 = vrot.slane %v2514, %v2518
        %v2521 = vadd.f32 %v2506, %v2519
        %v2522 = vadd.f32 %v2507, %v2519
        %v2523 = vadd.f32 %v2508, %v2519
        %v2524 = vadd.f32 %v2509, %v2519
        %v2525 = vadd.f32 %v2510, %v2519
        %v2526 = vadd.f32 %v2511, %v2519
        %v2527 = vadd.f32 %v2512, %v2519
        %v2528 = vadd.f32 %v2513, %v2519
        %v2529 = vmax.f32 %v2521, 0.0
        %v2530 = vmax.f32 %v2522, 0.0
        %v2531 = vmax.f32 %v2523, 0.0
        %v2532 = vmax.f32 %v2524, 0.0
        %v2533 = vmax.f32 %v2525, 0.0
        %v2534 = vmax.f32 %v2526, 0.0
        %v2535 = vmax.f32 %v2527, 0.0
        %v2536 = vmax.f32 %v2528, 0.0
        %v2537 = vpack.c.bf16 %v2530, %v2529
        %v2538 = vpack.c.bf16 %v2532, %v2531
        %v2539 = vpack.c.bf16 %v2534, %v2533
        %v2540 = vpack.c.bf16 %v2536, %v2535
        %v2541 = vld [vmem:[%s5] sm:$0xf]
        %v2542 = vld [vmem:[%s5 + $0x4] sm:$0xf]
        %v2543 = vld [vmem:[%s8] sm:$0x1]
        %v2545 = vlaneseq
        %v2546 = vshrl.u32 %v2545, 7
        %v2547 = vsub.s32 0, %v2546
        %v2548 = vrot.slane %v2543, %v2547
        %v2552 = vunpack.c.l.b16 %v2541
        %v2553 = vunpack.c.l.b16 %v2542
        %v2554 = vpack.c.b16 %v2553, %v2552
        %v2557 = vsel %vm1211, %v2537, 0
        %v2560 = vsel %vm1211, %v2538, 0
        %v2563 = vsel %vm1211, %v2539, 0
        %v2566 = vsel %vm1211, %v2540, 0
        %2568 = vmatprep.subr.bf16.mxu0 0
        %2569 = vmatpush1.bf16.msra.mxu0 %v2554
        %2570 = vmatprep.subr.bf16.mxu0 0
        %2571 = vmatpush1.bf16.msra.mxu0 0
        %2572 = vmatprep.subr.bf16.mxu0 0
        %2573 = vmatpush1.bf16.msra.mxu0 0
        %2574 = vmatprep.subr.bf16.mxu0 0
        %2575 = vmatpush1.bf16.msra.mxu0 0
        %2576 = vmatprep.subr.bf16.mxu0 0
        %2577 = vmatpush1.bf16.msra.mxu0 0
        %2578 = vmatprep.subr.bf16.mxu0 0
        %2579 = vmatpush1.bf16.msra.mxu0 0
        %2580 = vmatprep.subr.bf16.mxu0 0
        %2581 = vmatpush1.bf16.msra.mxu0 0
        %2582 = vmatprep.subr.bf16.mxu0 0
        %2583 = vmatpush1.bf16.msra.mxu0 0
        %2584 = vmatprep.subr.bf16.mxu0 0
        %2585 = vmatpush1.bf16.msra.mxu0 0
        %2586 = vmatprep.subr.bf16.mxu0 0
        %2587 = vmatpush1.bf16.msra.mxu0 0
        %2588 = vmatprep.subr.bf16.mxu0 0
        %2589 = vmatpush1.bf16.msra.mxu0 0
        %2590 = vmatprep.subr.bf16.mxu0 0
        %2591 = vmatpush1.bf16.msra.mxu0 0
        %2592 = vmatprep.subr.bf16.mxu0 0
        %2593 = vmatpush1.bf16.msra.mxu0 0
        %2594 = vmatprep.subr.bf16.mxu0 0
        %2595 = vmatpush1.bf16.msra.mxu0 0
        %2596 = vmatprep.subr.bf16.mxu0 0
        %2597 = vmatpush1.bf16.msra.mxu0 0
        %2598 = vmatprep.subr.bf16.mxu0 0
        %2599 = vmatpush1.bf16.msra.mxu0 0
        %2600 = vmatprep.mubr.bf16.mxu0 0
        %2601 = vmatmul.mubr.bf16.gmra.mrb[0].mxu0 %v2557
        %v2602 = vpop.f32.mrb[0].mxu0
        %v2603 = vadd.f32 %v2548, %v2602
        %v2604 = vpop.f32.mrb[0].mxu0
        %v2605 = vpop.f32.mrb[0].mxu0
        %v2606 = vadd.f32 %v2548, %v2605
        %v2607 = vpop.f32.mrb[0].mxu0
        %2608 = vmatprep.mubr.bf16.mxu0 0
        %2609 = vmatmul.mubr.bf16.gmra.mrb[0].mxu0 %v2560
        %v2610 = vpop.f32.mrb[0].mxu0
        %v2611 = vadd.f32 %v2548, %v2610
        %v2612 = vpop.f32.mrb[0].mxu0
        %v2613 = vpop.f32.mrb[0].mxu0
        %v2614 = vadd.f32 %v2548, %v2613
        %v2615 = vpop.f32.mrb[0].mxu0
        %2616 = vmatprep.mubr.bf16.mxu0 0
        %2617 = vmatmul.mubr.bf16.gmra.mrb[0].mxu0 %v2563
        %v2618 = vpop.f32.mrb[0].mxu0
        %v2619 = vadd.f32 %v2548, %v2618
        %v2620 = vpop.f32.mrb[0].mxu0
        %v2621 = vpop.f32.mrb[0].mxu0
        %v2622 = vadd.f32 %v2548, %v2621
        %v2623 = vpop.f32.mrb[0].mxu0
        %2624 = vmatprep.mubr.bf16.mxu0 0
        %2625 = vmatmul.mubr.bf16.gmra.mrb[0].mxu0 %v2566
        %v2626 = vpop.f32.mrb[0].mxu0
        %v2627 = vadd.f32 %v2548, %v2626
        %v2628 = vpop.f32.mrb[0].mxu0
        %v2629 = vpop.f32.mrb[0].mxu0
        %v2630 = vadd.f32 %v2548, %v2629
        %v2631 = vpop.f32.mrb[0].mxu0
        %2632 = vdwg.mxu0
        %v2633 = vld [vmem:[%s428] sm:$0xff]
        %v2634 = vld [vmem:[%s428 + $0x8] sm:$0xff]
        %v2635 = vld [vmem:[%s428 + $0x10] sm:$0xff]
        %v2636 = vld [vmem:[%s428 + $0x18] sm:$0xff]
        %v2637 = vld [vmem:[%s428 + $0x20] sm:$0xff]
        %v2638 = vld [vmem:[%s428 + $0x28] sm:$0xff]
        %v2639 = vld [vmem:[%s428 + $0x30] sm:$0xff]
        %v2640 = vld [vmem:[%s428 + $0x38] sm:$0xff]
        %v2641 = vadd.f32 %v2603, %v2633
        %v2642 = vadd.f32 %v2606, %v2634
        %v2643 = vadd.f32 %v2611, %v2635
        %v2644 = vadd.f32 %v2614, %v2636
        %v2645 = vadd.f32 %v2619, %v2637
        %v2646 = vadd.f32 %v2622, %v2638
        %v2647 = vadd.f32 %v2627, %v2639
        %v2648 = vadd.f32 %v2630, %v2640
        %v2649 = vmax.f32 %v2641, 0.0
        %v2650 = vmax.f32 %v2642, 0.0
        %v2651 = vmax.f32 %v2643, 0.0
        %v2652 = vmax.f32 %v2644, 0.0
        %v2653 = vmax.f32 %v2645, 0.0
        %v2654 = vmax.f32 %v2646, 0.0
        %v2655 = vmax.f32 %v2647, 0.0
        %v2656 = vmax.f32 %v2648, 0.0
        %2657 = vst.msk [vmem:[%s490] sm:$0xff] %vm598, %v2649
        %2658 = vst.msk [vmem:[%s490 + $0x8] sm:$0xff] %vm598, %v2650
        %2659 = vst.msk [vmem:[%s490 + $0x10] sm:$0xff] %vm598, %v2651
        %2660 = vst.msk [vmem:[%s490 + $0x18] sm:$0xff] %vm598, %v2652
        %2661 = vst.msk [vmem:[%s490 + $0x20] sm:$0xff] %vm598, %v2653
        %2662 = vst.msk [vmem:[%s490 + $0x28] sm:$0xff] %vm598, %v2654
        %2663 = vst.msk [vmem:[%s490 + $0x30] sm:$0xff] %vm598, %v2655
        %2664 = vst.msk [vmem:[%s490 + $0x38] sm:$0xff] %vm598, %v2656
        %s2665 = sand.u32 %s285, 1
        %s2666 = scalar_lea.sflag [#allocation5], %s2665
        %s2667 = sand.u32 %s285, 1
        %s2668 = smul.addr %s2667, 64
        %s2669 = scalar_lea.vmem [#allocation9], %s2668
        // Predicated region
        $region69: #{bottleneck_forward.1} parent=55 // pred_check
          %p2670 = pneg %p295
        $region70: #{bottleneck_forward.1} parent=55 // pred_check_branch
          %2672 = sbr.rel (%p2670) target = $region72
        $region71: #{bottleneck_forward.1} parent=55 // pred_region
          %s2673 = smul.u32 4, %s34
          %s2675 = ssub.s32 1024, 1024
          %2676 = vsyncadd %s2666, %s2675
          %s2677 = smul.addr %s2673, 2
          %s2678 = smul.addr %s33, 32
          %s2679 = sadd.s32 %s2677, %s2678
          %s2680 = smul.addr %s2679, 128
          %s2681 = scalar_lea.hbm %s9, %s2680
          %s2682 = sshll.u32 %s2669, 4
          %s2683 = int_to_ptr.vmem [resolvable:$true] %s2682
          %2688 = dma.vmem_to_hbm [thread:$0]  %s2683, 1024, %s2681, %s2666, 128, 128, 8
        $region72: #{bottleneck_forward.1} parent=55 // pred_fallthru
          _
      $region56: #{bottleneck_forward.1} parent=5 // pred_fallthru
        _
      %p2689 = scmp.le.s32.totalorder 2, %s24
      // Predicated region
      $region73: #{bottleneck_forward.1} parent=5 // pred_check
        %p2690 = pneg %p2689
      $region74: #{bottleneck_forward.1} parent=5 // pred_check_branch
        %2692 = sbr.rel (%p2690) target = $region76
      $region75: #{bottleneck_forward.1} parent=5 // pred_region
        %s2693 = ssub.s32 %s24, 2
        // Predicated region
        $region77: #{bottleneck_forward.1} parent=75 // pred_check
          %p2694 = pneg %p301
        $region78: #{bottleneck_forward.1} parent=75 // pred_check_branch
          %2696 = sbr.rel (%p2694) target = $region80
        $region79: #{bottleneck_forward.1} parent=75 // pred_region
          %s2697 = sand.u32 %s286, 1
          %s2698 = scalar_lea.sflag [#allocation5], %s2697
          %s2699 = sand.u32 %s286, 1
          %s2700 = smul.addr %s2699, 64
          %s2701 = scalar_lea.vmem [#allocation9], %s2700
          %2702 = dma.done %s2698, 1024
        $region80: #{bottleneck_forward.1} parent=75 // pred_fallthru
          _
      $region76: #{bottleneck_forward.1} parent=5 // pred_fallthru
        _
    $region6: #{bottleneck_forward.1} parent=1 // loop_footer
      %s28 = sadd.s32 1, %s24
    $region7: #{bottleneck_forward.1} parent=1 // loop_footer_branch
      %23 = sbr.rel target = $region3
    $region8: #{bottleneck_forward.1} parent=1 // loop_exit
      _
    %2703 = vsyncpa [#allocation4], 1
    %s2704 = scalar_lea.sflag [#allocation4], 1
    %2705 = vsyncpa %s2704, 1
    %2706 = vsyncpa [#allocation7], 1
    %s2707 = scalar_lea.sflag [#allocation7], 1
    %2708 = vsyncpa %s2707, 1
    %2709 = vsyncpa [#allocation5], 1
    %s2710 = scalar_lea.sflag [#allocation5], 1
    %2711 = vsyncpa %s2710, 1

</llo_original>
